<compile_context>
chip_gen: v5e
topology: v5e:2x2
jax: 0.10.0
libtpu: 0.0.40
codegen_flags: <defaults>
</compile_context>

<pallas_src>
import jax
import jax.numpy as jnp
from jax.experimental import pallas as pl
from jax.experimental.pallas import tpu as pltpu


def _upsample_conv_kernel(xp_ref, w_ref, b_ref, o_ref):
    """One (batch, row-tile) grid step.

    xp_ref : (1, C, H+2, Wo+2)  column-upsampled, zero-padded input (VMEM)
    w_ref  : (2*2*3*C*C,)       folded weights W2[pi, a, kw, co, ci] (SMEM)
    b_ref  : (C,)               bias (SMEM)
    o_ref  : (1, C, TH, 2*Wo)   phase-packed output: lane index pi*Wo + j holds
                                output pixel (2*r + pi, j) of source row r
    """
    C = o_ref.shape[1]
    TH = o_ref.shape[2]
    WO = o_ref.shape[3] // 2

    # First source row handled by this grid step (a multiple of the tile height).
    base = pl.multiple_of(pl.program_id(1) * TH, TH)

    def widx(pi, a, kw, co, ci):
        return (((pi * 2 + a) * 3 + kw) * C + co) * C + ci

    # acc[pi][co]: (TH, Wo) accumulator for output-row-phase pi, out-channel co.
    acc = [[jnp.zeros((TH, WO), jnp.float32) for _ in range(C)] for _ in range(2)]

    # dr = pi + a is the padded-source-row offset read by (row-phase pi, tap a).
    taps_by_dr = (((0, 0),), ((0, 1), (1, 0)), ((1, 1),))

    for ci in range(C):
        for dr in range(3):
            rows = xp_ref[0, ci, pl.ds(base + dr, TH), :]            # (TH, Wo+2)
            for kw in range(3):
                s = rows[:, kw:kw + WO]                              # (TH, Wo)
                for (pi, a) in taps_by_dr[dr]:
                    for co in range(C):
                        w = w_ref[widx(pi, a, kw, co, ci)]           # SMEM scalar
                        acc[pi][co] = acc[pi][co] + w * s            # VPU FMA

    for co in range(C):
        b = b_ref[co]
        for pi in range(2):
            o_ref[0, co, :, pl.ds(pi * WO, WO)] = (
                acc[pi][co] + b).astype(o_ref.dtype)


def upsample_forward(x_nchw, weight_oihw, bias):
    """Nearest 2x upsample + 3x3 same-padding conv.  I/O in NCHW (PyTorch)."""
    N, C, H, W = x_nchw.shape
    Ho, Wo = 2 * H, 2 * W

    TH = 8 if H % 8 == 0 else H          # source rows per grid step
    n_h_tiles = H // TH

    # Column-direction nearest upsample + zero pad at ORIGINAL height.
    # TODO(synk): also fold the column upsample in-kernel; that needs a 2x lane
    # riffle-interleave which Pallas/Mosaic has no cheap primitive for.
    xw = jnp.repeat(x_nchw, 2, axis=3)                        # (N, C, H, Wo)
    xp = jnp.pad(xw, ((0, 0), (0, 0), (1, 1), (1, 1)))        # (N, C, H+2, Wo+2)

    # Fold the row upsample into the 3x3 weights (kh taps collapse to 2 per
    # output-row phase):
    #   even output row 2r   : source rows (r-1, r  ) with taps (w0, w1+w2)
    #   odd  output row 2r+1 : source rows (r,   r+1) with taps (w0+w1, w2)
    w = weight_oihw.astype(jnp.float32)                       # (co, ci, kh, kw)
    w2 = jnp.stack([
        jnp.stack([w[:, :, 0, :], w[:, :, 1, :] + w[:, :, 2, :]], axis=0),
        jnp.stack([w[:, :, 0, :] + w[:, :, 1, :], w[:, :, 2, :]], axis=0),
    ], axis=0)                                                # (pi, a, co, ci, kw)
    w2_flat = jnp.transpose(w2, (0, 1, 4, 2, 3)).reshape(-1)  # (pi, a, kw, co, ci)
    b_flat = bias.astype(jnp.float32)

    out_packed = pl.pallas_call(
        _upsample_conv_kernel,
        out_shape=jax.ShapeDtypeStruct((N, C, H, 2 * Wo), x_nchw.dtype),
        grid_spec=pltpu.PrefetchScalarGridSpec(
            num_scalar_prefetch=0,
            grid=(N, n_h_tiles),
            in_specs=[
                # Whole padded image of one batch element; the index map ignores
                # the row-tile axis so consecutive h-steps reuse the same block.
                pl.BlockSpec((1, C, H + 2, Wo + 2), lambda n, h: (n, 0, 0, 0)),
                pl.BlockSpec(memory_space=pltpu.MemorySpace.SMEM),
                pl.BlockSpec(memory_space=pltpu.MemorySpace.SMEM),
            ],
            out_specs=pl.BlockSpec((1, C, TH, 2 * Wo), lambda n, h: (n, 0, h, 0)),
        ),
        compiler_params=pltpu.CompilerParams(
            dimension_semantics=("parallel", "parallel")),
    )(xp, w2_flat, b_flat)

    # Metadata-only reshape: packed lane index pi*Wo + j of source row r is
    # exactly output pixel (2r + pi, j).
    return out_packed.reshape(N, C, Ho, Wo)


def _reference(x_nchw, weight_oihw, bias):
    """Pure-JAX reference for the same forward pass."""
    x_up = jnp.repeat(jnp.repeat(x_nchw, 2, axis=2), 2, axis=3)
    y = jax.lax.conv_general_dilated(
        x_up, weight_oihw, window_strides=(1, 1),
        padding=((1, 1), (1, 1)),
        dimension_numbers=("NCHW", "OIHW", "NCHW"),
        precision=jax.lax.Precision.HIGHEST)
    return y + bias[None, :, None, None]


if __name__ == "__main__":
    # Small shapes consistent with Upsample(in_channels=4) on a 16x16 image.
    N, C, H, W = 2, 4, 16, 16

    key = jax.random.PRNGKey(0)
    kx, kw, kb = jax.random.split(key, 3)

    x = jax.random.normal(kx, (N, C, H, W), dtype=jnp.float32)

    # Deterministic PyTorch-style Conv2d init: U(-1/sqrt(fan_in), 1/sqrt(fan_in)).
    fan_in = C * 3 * 3
    bound = 1.0 / jnp.sqrt(jnp.float32(fan_in))
    weight = jax.random.uniform(kw, (C, C, 3, 3), jnp.float32, -bound, bound)
    bias = jax.random.uniform(kb, (C,), jnp.float32, -bound, bound)

    y = upsample_forward(x, weight, bias)
    y = jax.block_until_ready(y)

    assert y.shape == (N, C, 2 * H, 2 * W), y.shape
    assert y.dtype == jnp.float32

    y_ref = jax.block_until_ready(_reference(x, weight, bias))
    assert jnp.allclose(y, y_ref, rtol=2e-3, atol=2e-3), (
        float(jnp.max(jnp.abs(y - y_ref))))

    print("KERNEL_OK")
</pallas_src>

<mosaic_0001>
module attributes {stable_mosaic.version = 11 : i64} {
  func.func @_upsample_conv_kernel(%arg0: i32, %arg1: i32, %arg2: memref<1x4x18x34xf32, #tpu.memory_space<vmem>>, %arg3: memref<192xf32, #tpu.memory_space<smem>>, %arg4: memref<4xf32, #tpu.memory_space<smem>>, %arg5: memref<1x4x8x64xf32, #tpu.memory_space<vmem>>) attributes {dimension_semantics = [#tpu.dimension_semantics<parallel>, #tpu.dimension_semantics<parallel>], iteration_bounds = array<i64: 2, 2>, scalar_prefetch = 0 : i64, scratch_operands = 0 : i64, tpu.core_type = #tpu.core_type<tc>, window_params = [{transform_indices = @transform_0, window_bounds = array<i64: 1, 4, 18, 34>}, {transform_indices = @transform_1, window_bounds = array<i64: 192>}, {transform_indices = @transform_2, window_bounds = array<i64: 4>}, {transform_indices = @transform_3, window_bounds = array<i64: 1, 4, 8, 64>}]} {
    %c8_i32 = arith.constant 8 : i32
    %0 = arith.muli %arg1, %c8_i32 : i32
    %1 = tpu.assume_multiple %0, 8 : i32
    %cst = arith.constant 0.000000e+00 : f32
    %2 = vector.broadcast %cst : f32 to vector<8x32xf32>
    %cst_0 = arith.constant 0.000000e+00 : f32
    %3 = vector.broadcast %cst_0 : f32 to vector<8x32xf32>
    %cst_1 = arith.constant 0.000000e+00 : f32
    %4 = vector.broadcast %cst_1 : f32 to vector<8x32xf32>
    %cst_2 = arith.constant 0.000000e+00 : f32
    %5 = vector.broadcast %cst_2 : f32 to vector<8x32xf32>
    %cst_3 = arith.constant 0.000000e+00 : f32
    %6 = vector.broadcast %cst_3 : f32 to vector<8x32xf32>
    %cst_4 = arith.constant 0.000000e+00 : f32
    %7 = vector.broadcast %cst_4 : f32 to vector<8x32xf32>
    %cst_5 = arith.constant 0.000000e+00 : f32
    %8 = vector.broadcast %cst_5 : f32 to vector<8x32xf32>
    %cst_6 = arith.constant 0.000000e+00 : f32
    %9 = vector.broadcast %cst_6 : f32 to vector<8x32xf32>
    %c0_i32 = arith.constant 0 : i32
    %10 = arith.addi %1, %c0_i32 : i32
    %c0 = arith.constant 0 : index
    %c0_7 = arith.constant 0 : index
    %11 = arith.index_cast %10 : i32 to index
    %c0_8 = arith.constant 0 : index
    %12 = vector.load %arg2[%c0, %c0_7, %11, %c0_8] : memref<1x4x18x34xf32, #tpu.memory_space<vmem>>, vector<1x1x8x34xf32>
    %13 = vector.shape_cast %12 : vector<1x1x8x34xf32> to vector<8x34xf32>
    %14 = vector.extract_strided_slice %13 {offsets = [0, 0], sizes = [8, 32], strides = [1, 1]} : vector<8x34xf32> to vector<8x32xf32>
    %c0_9 = arith.constant 0 : index
    %15 = memref.load %arg3[%c0_9] : memref<192xf32, #tpu.memory_space<smem>>
    %16 = vector.broadcast %15 : f32 to vector<8x32xf32>
    %17 = arith.mulf %16, %14 : vector<8x32xf32>
    %18 = arith.addf %2, %17 : vector<8x32xf32>
    %c4 = arith.constant 4 : index
    %19 = memref.load %arg3[%c4] : memref<192xf32, #tpu.memory_space<smem>>
    %20 = vector.broadcast %19 : f32 to vector<8x32xf32>
    %21 = arith.mulf %20, %14 : vector<8x32xf32>
    %22 = arith.addf %3, %21 : vector<8x32xf32>
    %c8 = arith.constant 8 : index
    %23 = memref.load %arg3[%c8] : memref<192xf32, #tpu.memory_space<smem>>
    %24 = vector.broadcast %23 : f32 to vector<8x32xf32>
    %25 = arith.mulf %24, %14 : vector<8x32xf32>
    %26 = arith.addf %4, %25 : vector<8x32xf32>
    %c12 = arith.constant 12 : index
    %27 = memref.load %arg3[%c12] : memref<192xf32, #tpu.memory_space<smem>>
    %28 = vector.broadcast %27 : f32 to vector<8x32xf32>
    %29 = arith.mulf %28, %14 : vector<8x32xf32>
    %30 = arith.addf %5, %29 : vector<8x32xf32>
    %31 = vector.extract_strided_slice %13 {offsets = [0, 1], sizes = [8, 32], strides = [1, 1]} : vector<8x34xf32> to vector<8x32xf32>
    %c16 = arith.constant 16 : index
    %32 = memref.load %arg3[%c16] : memref<192xf32, #tpu.memory_space<smem>>
    %33 = vector.broadcast %32 : f32 to vector<8x32xf32>
    %34 = arith.mulf %33, %31 : vector<8x32xf32>
    %35 = arith.addf %18, %34 : vector<8x32xf32>
    %c20 = arith.constant 20 : index
    %36 = memref.load %arg3[%c20] : memref<192xf32, #tpu.memory_space<smem>>
    %37 = vector.broadcast %36 : f32 to vector<8x32xf32>
    %38 = arith.mulf %37, %31 : vector<8x32xf32>
    %39 = arith.addf %22, %38 : vector<8x32xf32>
    %c24 = arith.constant 24 : index
    %40 = memref.load %arg3[%c24] : memref<192xf32, #tpu.memory_space<smem>>
    %41 = vector.broadcast %40 : f32 to vector<8x32xf32>
    %42 = arith.mulf %41, %31 : vector<8x32xf32>
    %43 = arith.addf %26, %42 : vector<8x32xf32>
    %c28 = arith.constant 28 : index
    %44 = memref.load %arg3[%c28] : memref<192xf32, #tpu.memory_space<smem>>
    %45 = vector.broadcast %44 : f32 to vector<8x32xf32>
    %46 = arith.mulf %45, %31 : vector<8x32xf32>
    %47 = arith.addf %30, %46 : vector<8x32xf32>
    %48 = vector.extract_strided_slice %13 {offsets = [0, 2], sizes = [8, 32], strides = [1, 1]} : vector<8x34xf32> to vector<8x32xf32>
    %c32 = arith.constant 32 : index
    %49 = memref.load %arg3[%c32] : memref<192xf32, #tpu.memory_space<smem>>
    %50 = vector.broadcast %49 : f32 to vector<8x32xf32>
    %51 = arith.mulf %50, %48 : vector<8x32xf32>
    %52 = arith.addf %35, %51 : vector<8x32xf32>
    %c36 = arith.constant 36 : index
    %53 = memref.load %arg3[%c36] : memref<192xf32, #tpu.memory_space<smem>>
    %54 = vector.broadcast %53 : f32 to vector<8x32xf32>
    %55 = arith.mulf %54, %48 : vector<8x32xf32>
    %56 = arith.addf %39, %55 : vector<8x32xf32>
    %c40 = arith.constant 40 : index
    %57 = memref.load %arg3[%c40] : memref<192xf32, #tpu.memory_space<smem>>
    %58 = vector.broadcast %57 : f32 to vector<8x32xf32>
    %59 = arith.mulf %58, %48 : vector<8x32xf32>
    %60 = arith.addf %43, %59 : vector<8x32xf32>
    %c44 = arith.constant 44 : index
    %61 = memref.load %arg3[%c44] : memref<192xf32, #tpu.memory_space<smem>>
    %62 = vector.broadcast %61 : f32 to vector<8x32xf32>
    %63 = arith.mulf %62, %48 : vector<8x32xf32>
    %64 = arith.addf %47, %63 : vector<8x32xf32>
    %c1_i32 = arith.constant 1 : i32
    %65 = arith.addi %1, %c1_i32 : i32
    %c0_10 = arith.constant 0 : index
    %c0_11 = arith.constant 0 : index
    %66 = arith.index_cast %65 : i32 to index
    %c0_12 = arith.constant 0 : index
    %67 = vector.load %arg2[%c0_10, %c0_11, %66, %c0_12] : memref<1x4x18x34xf32, #tpu.memory_space<vmem>>, vector<1x1x8x34xf32>
    %68 = vector.shape_cast %67 : vector<1x1x8x34xf32> to vector<8x34xf32>
    %69 = vector.extract_strided_slice %68 {offsets = [0, 0], sizes = [8, 32], strides = [1, 1]} : vector<8x34xf32> to vector<8x32xf32>
    %c48 = arith.constant 48 : index
    %70 = memref.load %arg3[%c48] : memref<192xf32, #tpu.memory_space<smem>>
    %71 = vector.broadcast %70 : f32 to vector<8x32xf32>
    %72 = arith.mulf %71, %69 : vector<8x32xf32>
    %73 = arith.addf %52, %72 : vector<8x32xf32>
    %c52 = arith.constant 52 : index
    %74 = memref.load %arg3[%c52] : memref<192xf32, #tpu.memory_space<smem>>
    %75 = vector.broadcast %74 : f32 to vector<8x32xf32>
    %76 = arith.mulf %75, %69 : vector<8x32xf32>
    %77 = arith.addf %56, %76 : vector<8x32xf32>
    %c56 = arith.constant 56 : index
    %78 = memref.load %arg3[%c56] : memref<192xf32, #tpu.memory_space<smem>>
    %79 = vector.broadcast %78 : f32 to vector<8x32xf32>
    %80 = arith.mulf %79, %69 : vector<8x32xf32>
    %81 = arith.addf %60, %80 : vector<8x32xf32>
    %c60 = arith.constant 60 : index
    %82 = memref.load %arg3[%c60] : memref<192xf32, #tpu.memory_space<smem>>
    %83 = vector.broadcast %82 : f32 to vector<8x32xf32>
    %84 = arith.mulf %83, %69 : vector<8x32xf32>
    %85 = arith.addf %64, %84 : vector<8x32xf32>
    %c96 = arith.constant 96 : index
    %86 = memref.load %arg3[%c96] : memref<192xf32, #tpu.memory_space<smem>>
    %87 = vector.broadcast %86 : f32 to vector<8x32xf32>
    %88 = arith.mulf %87, %69 : vector<8x32xf32>
    %89 = arith.addf %6, %88 : vector<8x32xf32>
    %c100 = arith.constant 100 : index
    %90 = memref.load %arg3[%c100] : memref<192xf32, #tpu.memory_space<smem>>
    %91 = vector.broadcast %90 : f32 to vector<8x32xf32>
    %92 = arith.mulf %91, %69 : vector<8x32xf32>
    %93 = arith.addf %7, %92 : vector<8x32xf32>
    %c104 = arith.constant 104 : index
    %94 = memref.load %arg3[%c104] : memref<192xf32, #tpu.memory_space<smem>>
    %95 = vector.broadcast %94 : f32 to vector<8x32xf32>
    %96 = arith.mulf %95, %69 : vector<8x32xf32>
    %97 = arith.addf %8, %96 : vector<8x32xf32>
    %c108 = arith.constant 108 : index
    %98 = memref.load %arg3[%c108] : memref<192xf32, #tpu.memory_space<smem>>
    %99 = vector.broadcast %98 : f32 to vector<8x32xf32>
    %100 = arith.mulf %99, %69 : vector<8x32xf32>
    %101 = arith.addf %9, %100 : vector<8x32xf32>
    %102 = vector.extract_strided_slice %68 {offsets = [0, 1], sizes = [8, 32], strides = [1, 1]} : vector<8x34xf32> to vector<8x32xf32>
    %c64 = arith.constant 64 : index
    %103 = memref.load %arg3[%c64] : memref<192xf32, #tpu.memory_space<smem>>
    %104 = vector.broadcast %103 : f32 to vector<8x32xf32>
    %105 = arith.mulf %104, %102 : vector<8x32xf32>
    %106 = arith.addf %73, %105 : vector<8x32xf32>
    %c68 = arith.constant 68 : index
    %107 = memref.load %arg3[%c68] : memref<192xf32, #tpu.memory_space<smem>>
    %108 = vector.broadcast %107 : f32 to vector<8x32xf32>
    %109 = arith.mulf %108, %102 : vector<8x32xf32>
    %110 = arith.addf %77, %109 : vector<8x32xf32>
    %c72 = arith.constant 72 : index
    %111 = memref.load %arg3[%c72] : memref<192xf32, #tpu.memory_space<smem>>
    %112 = vector.broadcast %111 : f32 to vector<8x32xf32>
    %113 = arith.mulf %112, %102 : vector<8x32xf32>
    %114 = arith.addf %81, %113 : vector<8x32xf32>
    %c76 = arith.constant 76 : index
    %115 = memref.load %arg3[%c76] : memref<192xf32, #tpu.memory_space<smem>>
    %116 = vector.broadcast %115 : f32 to vector<8x32xf32>
    %117 = arith.mulf %116, %102 : vector<8x32xf32>
    %118 = arith.addf %85, %117 : vector<8x32xf32>
    %c112 = arith.constant 112 : index
    %119 = memref.load %arg3[%c112] : memref<192xf32, #tpu.memory_space<smem>>
    %120 = vector.broadcast %119 : f32 to vector<8x32xf32>
    %121 = arith.mulf %120, %102 : vector<8x32xf32>
    %122 = arith.addf %89, %121 : vector<8x32xf32>
    %c116 = arith.constant 116 : index
    %123 = memref.load %arg3[%c116] : memref<192xf32, #tpu.memory_space<smem>>
    %124 = vector.broadcast %123 : f32 to vector<8x32xf32>
    %125 = arith.mulf %124, %102 : vector<8x32xf32>
    %126 = arith.addf %93, %125 : vector<8x32xf32>
    %c120 = arith.constant 120 : index
    %127 = memref.load %arg3[%c120] : memref<192xf32, #tpu.memory_space<smem>>
    %128 = vector.broadcast %127 : f32 to vector<8x32xf32>
    %129 = arith.mulf %128, %102 : vector<8x32xf32>
    %130 = arith.addf %97, %129 : vector<8x32xf32>
    %c124 = arith.constant 124 : index
    %131 = memref.load %arg3[%c124] : memref<192xf32, #tpu.memory_space<smem>>
    %132 = vector.broadcast %131 : f32 to vector<8x32xf32>
    %133 = arith.mulf %132, %102 : vector<8x32xf32>
    %134 = arith.addf %101, %133 : vector<8x32xf32>
    %135 = vector.extract_strided_slice %68 {offsets = [0, 2], sizes = [8, 32], strides = [1, 1]} : vector<8x34xf32> to vector<8x32xf32>
    %c80 = arith.constant 80 : index
    %136 = memref.load %arg3[%c80] : memref<192xf32, #tpu.memory_space<smem>>
    %137 = vector.broadcast %136 : f32 to vector<8x32xf32>
    %138 = arith.mulf %137, %135 : vector<8x32xf32>
    %139 = arith.addf %106, %138 : vector<8x32xf32>
    %c84 = arith.constant 84 : index
    %140 = memref.load %arg3[%c84] : memref<192xf32, #tpu.memory_space<smem>>
    %141 = vector.broadcast %140 : f32 to vector<8x32xf32>
    %142 = arith.mulf %141, %135 : vector<8x32xf32>
    %143 = arith.addf %110, %142 : vector<8x32xf32>
    %c88 = arith.constant 88 : index
    %144 = memref.load %arg3[%c88] : memref<192xf32, #tpu.memory_space<smem>>
    %145 = vector.broadcast %144 : f32 to vector<8x32xf32>
    %146 = arith.mulf %145, %135 : vector<8x32xf32>
    %147 = arith.addf %114, %146 : vector<8x32xf32>
    %c92 = arith.constant 92 : index
    %148 = memref.load %arg3[%c92] : memref<192xf32, #tpu.memory_space<smem>>
    %149 = vector.broadcast %148 : f32 to vector<8x32xf32>
    %150 = arith.mulf %149, %135 : vector<8x32xf32>
    %151 = arith.addf %118, %150 : vector<8x32xf32>
    %c128 = arith.constant 128 : index
    %152 = memref.load %arg3[%c128] : memref<192xf32, #tpu.memory_space<smem>>
    %153 = vector.broadcast %152 : f32 to vector<8x32xf32>
    %154 = arith.mulf %153, %135 : vector<8x32xf32>
    %155 = arith.addf %122, %154 : vector<8x32xf32>
    %c132 = arith.constant 132 : index
    %156 = memref.load %arg3[%c132] : memref<192xf32, #tpu.memory_space<smem>>
    %157 = vector.broadcast %156 : f32 to vector<8x32xf32>
    %158 = arith.mulf %157, %135 : vector<8x32xf32>
    %159 = arith.addf %126, %158 : vector<8x32xf32>
    %c136 = arith.constant 136 : index
    %160 = memref.load %arg3[%c136] : memref<192xf32, #tpu.memory_space<smem>>
    %161 = vector.broadcast %160 : f32 to vector<8x32xf32>
    %162 = arith.mulf %161, %135 : vector<8x32xf32>
    %163 = arith.addf %130, %162 : vector<8x32xf32>
    %c140 = arith.constant 140 : index
    %164 = memref.load %arg3[%c140] : memref<192xf32, #tpu.memory_space<smem>>
    %165 = vector.broadcast %164 : f32 to vector<8x32xf32>
    %166 = arith.mulf %165, %135 : vector<8x32xf32>
    %167 = arith.addf %134, %166 : vector<8x32xf32>
    %c2_i32 = arith.constant 2 : i32
    %168 = arith.addi %1, %c2_i32 : i32
    %c0_13 = arith.constant 0 : index
    %c0_14 = arith.constant 0 : index
    %169 = arith.index_cast %168 : i32 to index
    %c0_15 = arith.constant 0 : index
    %170 = vector.load %arg2[%c0_13, %c0_14, %169, %c0_15] : memref<1x4x18x34xf32, #tpu.memory_space<vmem>>, vector<1x1x8x34xf32>
    %171 = vector.shape_cast %170 : vector<1x1x8x34xf32> to vector<8x34xf32>
    %172 = vector.extract_strided_slice %171 {offsets = [0, 0], sizes = [8, 32], strides = [1, 1]} : vector<8x34xf32> to vector<8x32xf32>
    %c144 = arith.constant 144 : index
    %173 = memref.load %arg3[%c144] : memref<192xf32, #tpu.memory_space<smem>>
    %174 = vector.broadcast %173 : f32 to vector<8x32xf32>
    %175 = arith.mulf %174, %172 : vector<8x32xf32>
    %176 = arith.addf %155, %175 : vector<8x32xf32>
    %c148 = arith.constant 148 : index
    %177 = memref.load %arg3[%c148] : memref<192xf32, #tpu.memory_space<smem>>
    %178 = vector.broadcast %177 : f32 to vector<8x32xf32>
    %179 = arith.mulf %178, %172 : vector<8x32xf32>
    %180 = arith.addf %159, %179 : vector<8x32xf32>
    %c152 = arith.constant 152 : index
    %181 = memref.load %arg3[%c152] : memref<192xf32, #tpu.memory_space<smem>>
    %182 = vector.broadcast %181 : f32 to vector<8x32xf32>
    %183 = arith.mulf %182, %172 : vector<8x32xf32>
    %184 = arith.addf %163, %183 : vector<8x32xf32>
    %c156 = arith.constant 156 : index
    %185 = memref.load %arg3[%c156] : memref<192xf32, #tpu.memory_space<smem>>
    %186 = vector.broadcast %185 : f32 to vector<8x32xf32>
    %187 = arith.mulf %186, %172 : vector<8x32xf32>
    %188 = arith.addf %167, %187 : vector<8x32xf32>
    %189 = vector.extract_strided_slice %171 {offsets = [0, 1], sizes = [8, 32], strides = [1, 1]} : vector<8x34xf32> to vector<8x32xf32>
    %c160 = arith.constant 160 : index
    %190 = memref.load %arg3[%c160] : memref<192xf32, #tpu.memory_space<smem>>
    %191 = vector.broadcast %190 : f32 to vector<8x32xf32>
    %192 = arith.mulf %191, %189 : vector<8x32xf32>
    %193 = arith.addf %176, %192 : vector<8x32xf32>
    %c164 = arith.constant 164 : index
    %194 = memref.load %arg3[%c164] : memref<192xf32, #tpu.memory_space<smem>>
    %195 = vector.broadcast %194 : f32 to vector<8x32xf32>
    %196 = arith.mulf %195, %189 : vector<8x32xf32>
    %197 = arith.addf %180, %196 : vector<8x32xf32>
    %c168 = arith.constant 168 : index
    %198 = memref.load %arg3[%c168] : memref<192xf32, #tpu.memory_space<smem>>
    %199 = vector.broadcast %198 : f32 to vector<8x32xf32>
    %200 = arith.mulf %199, %189 : vector<8x32xf32>
    %201 = arith.addf %184, %200 : vector<8x32xf32>
    %c172 = arith.constant 172 : index
    %202 = memref.load %arg3[%c172] : memref<192xf32, #tpu.memory_space<smem>>
    %203 = vector.broadcast %202 : f32 to vector<8x32xf32>
    %204 = arith.mulf %203, %189 : vector<8x32xf32>
    %205 = arith.addf %188, %204 : vector<8x32xf32>
    %206 = vector.extract_strided_slice %171 {offsets = [0, 2], sizes = [8, 32], strides = [1, 1]} : vector<8x34xf32> to vector<8x32xf32>
    %c176 = arith.constant 176 : index
    %207 = memref.load %arg3[%c176] : memref<192xf32, #tpu.memory_space<smem>>
    %208 = vector.broadcast %207 : f32 to vector<8x32xf32>
    %209 = arith.mulf %208, %206 : vector<8x32xf32>
    %210 = arith.addf %193, %209 : vector<8x32xf32>
    %c180 = arith.constant 180 : index
    %211 = memref.load %arg3[%c180] : memref<192xf32, #tpu.memory_space<smem>>
    %212 = vector.broadcast %211 : f32 to vector<8x32xf32>
    %213 = arith.mulf %212, %206 : vector<8x32xf32>
    %214 = arith.addf %197, %213 : vector<8x32xf32>
    %c184 = arith.constant 184 : index
    %215 = memref.load %arg3[%c184] : memref<192xf32, #tpu.memory_space<smem>>
    %216 = vector.broadcast %215 : f32 to vector<8x32xf32>
    %217 = arith.mulf %216, %206 : vector<8x32xf32>
    %218 = arith.addf %201, %217 : vector<8x32xf32>
    %c188 = arith.constant 188 : index
    %219 = memref.load %arg3[%c188] : memref<192xf32, #tpu.memory_space<smem>>
    %220 = vector.broadcast %219 : f32 to vector<8x32xf32>
    %221 = arith.mulf %220, %206 : vector<8x32xf32>
    %222 = arith.addf %205, %221 : vector<8x32xf32>
    %c0_i32_16 = arith.constant 0 : i32
    %223 = arith.addi %1, %c0_i32_16 : i32
    %c0_17 = arith.constant 0 : index
    %c1 = arith.constant 1 : index
    %224 = arith.index_cast %223 : i32 to index
    %c0_18 = arith.constant 0 : index
    %225 = vector.load %arg2[%c0_17, %c1, %224, %c0_18] : memref<1x4x18x34xf32, #tpu.memory_space<vmem>>, vector<1x1x8x34xf32>
    %226 = vector.shape_cast %225 : vector<1x1x8x34xf32> to vector<8x34xf32>
    %227 = vector.extract_strided_slice %226 {offsets = [0, 0], sizes = [8, 32], strides = [1, 1]} : vector<8x34xf32> to vector<8x32xf32>
    %c1_19 = arith.constant 1 : index
    %228 = memref.load %arg3[%c1_19] : memref<192xf32, #tpu.memory_space<smem>>
    %229 = vector.broadcast %228 : f32 to vector<8x32xf32>
    %230 = arith.mulf %229, %227 : vector<8x32xf32>
    %231 = arith.addf %139, %230 : vector<8x32xf32>
    %c5 = arith.constant 5 : index
    %232 = memref.load %arg3[%c5] : memref<192xf32, #tpu.memory_space<smem>>
    %233 = vector.broadcast %232 : f32 to vector<8x32xf32>
    %234 = arith.mulf %233, %227 : vector<8x32xf32>
    %235 = arith.addf %143, %234 : vector<8x32xf32>
    %c9 = arith.constant 9 : index
    %236 = memref.load %arg3[%c9] : memref<192xf32, #tpu.memory_space<smem>>
    %237 = vector.broadcast %236 : f32 to vector<8x32xf32>
    %238 = arith.mulf %237, %227 : vector<8x32xf32>
    %239 = arith.addf %147, %238 : vector<8x32xf32>
    %c13 = arith.constant 13 : index
    %240 = memref.load %arg3[%c13] : memref<192xf32, #tpu.memory_space<smem>>
    %241 = vector.broadcast %240 : f32 to vector<8x32xf32>
    %242 = arith.mulf %241, %227 : vector<8x32xf32>
    %243 = arith.addf %151, %242 : vector<8x32xf32>
    %244 = vector.extract_strided_slice %226 {offsets = [0, 1], sizes = [8, 32], strides = [1, 1]} : vector<8x34xf32> to vector<8x32xf32>
    %c17 = arith.constant 17 : index
    %245 = memref.load %arg3[%c17] : memref<192xf32, #tpu.memory_space<smem>>
    %246 = vector.broadcast %245 : f32 to vector<8x32xf32>
    %247 = arith.mulf %246, %244 : vector<8x32xf32>
    %248 = arith.addf %231, %247 : vector<8x32xf32>
    %c21 = arith.constant 21 : index
    %249 = memref.load %arg3[%c21] : memref<192xf32, #tpu.memory_space<smem>>
    %250 = vector.broadcast %249 : f32 to vector<8x32xf32>
    %251 = arith.mulf %250, %244 : vector<8x32xf32>
    %252 = arith.addf %235, %251 : vector<8x32xf32>
    %c25 = arith.constant 25 : index
    %253 = memref.load %arg3[%c25] : memref<192xf32, #tpu.memory_space<smem>>
    %254 = vector.broadcast %253 : f32 to vector<8x32xf32>
    %255 = arith.mulf %254, %244 : vector<8x32xf32>
    %256 = arith.addf %239, %255 : vector<8x32xf32>
    %c29 = arith.constant 29 : index
    %257 = memref.load %arg3[%c29] : memref<192xf32, #tpu.memory_space<smem>>
    %258 = vector.broadcast %257 : f32 to vector<8x32xf32>
    %259 = arith.mulf %258, %244 : vector<8x32xf32>
    %260 = arith.addf %243, %259 : vector<8x32xf32>
    %261 = vector.extract_strided_slice %226 {offsets = [0, 2], sizes = [8, 32], strides = [1, 1]} : vector<8x34xf32> to vector<8x32xf32>
    %c33 = arith.constant 33 : index
    %262 = memref.load %arg3[%c33] : memref<192xf32, #tpu.memory_space<smem>>
    %263 = vector.broadcast %262 : f32 to vector<8x32xf32>
    %264 = arith.mulf %263, %261 : vector<8x32xf32>
    %265 = arith.addf %248, %264 : vector<8x32xf32>
    %c37 = arith.constant 37 : index
    %266 = memref.load %arg3[%c37] : memref<192xf32, #tpu.memory_space<smem>>
    %267 = vector.broadcast %266 : f32 to vector<8x32xf32>
    %268 = arith.mulf %267, %261 : vector<8x32xf32>
    %269 = arith.addf %252, %268 : vector<8x32xf32>
    %c41 = arith.constant 41 : index
    %270 = memref.load %arg3[%c41] : memref<192xf32, #tpu.memory_space<smem>>
    %271 = vector.broadcast %270 : f32 to vector<8x32xf32>
    %272 = arith.mulf %271, %261 : vector<8x32xf32>
    %273 = arith.addf %256, %272 : vector<8x32xf32>
    %c45 = arith.constant 45 : index
    %274 = memref.load %arg3[%c45] : memref<192xf32, #tpu.memory_space<smem>>
    %275 = vector.broadcast %274 : f32 to vector<8x32xf32>
    %276 = arith.mulf %275, %261 : vector<8x32xf32>
    %277 = arith.addf %260, %276 : vector<8x32xf32>
    %c1_i32_20 = arith.constant 1 : i32
    %278 = arith.addi %1, %c1_i32_20 : i32
    %c0_21 = arith.constant 0 : index
    %c1_22 = arith.constant 1 : index
    %279 = arith.index_cast %278 : i32 to index
    %c0_23 = arith.constant 0 : index
    %280 = vector.load %arg2[%c0_21, %c1_22, %279, %c0_23] : memref<1x4x18x34xf32, #tpu.memory_space<vmem>>, vector<1x1x8x34xf32>
    %281 = vector.shape_cast %280 : vector<1x1x8x34xf32> to vector<8x34xf32>
    %282 = vector.extract_strided_slice %281 {offsets = [0, 0], sizes = [8, 32], strides = [1, 1]} : vector<8x34xf32> to vector<8x32xf32>
    %c49 = arith.constant 49 : index
    %283 = memref.load %arg3[%c49] : memref<192xf32, #tpu.memory_space<smem>>
    %284 = vector.broadcast %283 : f32 to vector<8x32xf32>
    %285 = arith.mulf %284, %282 : vector<8x32xf32>
    %286 = arith.addf %265, %285 : vector<8x32xf32>
    %c53 = arith.constant 53 : index
    %287 = memref.load %arg3[%c53] : memref<192xf32, #tpu.memory_space<smem>>
    %288 = vector.broadcast %287 : f32 to vector<8x32xf32>
    %289 = arith.mulf %288, %282 : vector<8x32xf32>
    %290 = arith.addf %269, %289 : vector<8x32xf32>
    %c57 = arith.constant 57 : index
    %291 = memref.load %arg3[%c57] : memref<192xf32, #tpu.memory_space<smem>>
    %292 = vector.broadcast %291 : f32 to vector<8x32xf32>
    %293 = arith.mulf %292, %282 : vector<8x32xf32>
    %294 = arith.addf %273, %293 : vector<8x32xf32>
    %c61 = arith.constant 61 : index
    %295 = memref.load %arg3[%c61] : memref<192xf32, #tpu.memory_space<smem>>
    %296 = vector.broadcast %295 : f32 to vector<8x32xf32>
    %297 = arith.mulf %296, %282 : vector<8x32xf32>
    %298 = arith.addf %277, %297 : vector<8x32xf32>
    %c97 = arith.constant 97 : index
    %299 = memref.load %arg3[%c97] : memref<192xf32, #tpu.memory_space<smem>>
    %300 = vector.broadcast %299 : f32 to vector<8x32xf32>
    %301 = arith.mulf %300, %282 : vector<8x32xf32>
    %302 = arith.addf %210, %301 : vector<8x32xf32>
    %c101 = arith.constant 101 : index
    %303 = memref.load %arg3[%c101] : memref<192xf32, #tpu.memory_space<smem>>
    %304 = vector.broadcast %303 : f32 to vector<8x32xf32>
    %305 = arith.mulf %304, %282 : vector<8x32xf32>
    %306 = arith.addf %214, %305 : vector<8x32xf32>
    %c105 = arith.constant 105 : index
    %307 = memref.load %arg3[%c105] : memref<192xf32, #tpu.memory_space<smem>>
    %308 = vector.broadcast %307 : f32 to vector<8x32xf32>
    %309 = arith.mulf %308, %282 : vector<8x32xf32>
    %310 = arith.addf %218, %309 : vector<8x32xf32>
    %c109 = arith.constant 109 : index
    %311 = memref.load %arg3[%c109] : memref<192xf32, #tpu.memory_space<smem>>
    %312 = vector.broadcast %311 : f32 to vector<8x32xf32>
    %313 = arith.mulf %312, %282 : vector<8x32xf32>
    %314 = arith.addf %222, %313 : vector<8x32xf32>
    %315 = vector.extract_strided_slice %281 {offsets = [0, 1], sizes = [8, 32], strides = [1, 1]} : vector<8x34xf32> to vector<8x32xf32>
    %c65 = arith.constant 65 : index
    %316 = memref.load %arg3[%c65] : memref<192xf32, #tpu.memory_space<smem>>
    %317 = vector.broadcast %316 : f32 to vector<8x32xf32>
    %318 = arith.mulf %317, %315 : vector<8x32xf32>
    %319 = arith.addf %286, %318 : vector<8x32xf32>
    %c69 = arith.constant 69 : index
    %320 = memref.load %arg3[%c69] : memref<192xf32, #tpu.memory_space<smem>>
    %321 = vector.broadcast %320 : f32 to vector<8x32xf32>
    %322 = arith.mulf %321, %315 : vector<8x32xf32>
    %323 = arith.addf %290, %322 : vector<8x32xf32>
    %c73 = arith.constant 73 : index
    %324 = memref.load %arg3[%c73] : memref<192xf32, #tpu.memory_space<smem>>
    %325 = vector.broadcast %324 : f32 to vector<8x32xf32>
    %326 = arith.mulf %325, %315 : vector<8x32xf32>
    %327 = arith.addf %294, %326 : vector<8x32xf32>
    %c77 = arith.constant 77 : index
    %328 = memref.load %arg3[%c77] : memref<192xf32, #tpu.memory_space<smem>>
    %329 = vector.broadcast %328 : f32 to vector<8x32xf32>
    %330 = arith.mulf %329, %315 : vector<8x32xf32>
    %331 = arith.addf %298, %330 : vector<8x32xf32>
    %c113 = arith.constant 113 : index
    %332 = memref.load %arg3[%c113] : memref<192xf32, #tpu.memory_space<smem>>
    %333 = vector.broadcast %332 : f32 to vector<8x32xf32>
    %334 = arith.mulf %333, %315 : vector<8x32xf32>
    %335 = arith.addf %302, %334 : vector<8x32xf32>
    %c117 = arith.constant 117 : index
    %336 = memref.load %arg3[%c117] : memref<192xf32, #tpu.memory_space<smem>>
    %337 = vector.broadcast %336 : f32 to vector<8x32xf32>
    %338 = arith.mulf %337, %315 : vector<8x32xf32>
    %339 = arith.addf %306, %338 : vector<8x32xf32>
    %c121 = arith.constant 121 : index
    %340 = memref.load %arg3[%c121] : memref<192xf32, #tpu.memory_space<smem>>
    %341 = vector.broadcast %340 : f32 to vector<8x32xf32>
    %342 = arith.mulf %341, %315 : vector<8x32xf32>
    %343 = arith.addf %310, %342 : vector<8x32xf32>
    %c125 = arith.constant 125 : index
    %344 = memref.load %arg3[%c125] : memref<192xf32, #tpu.memory_space<smem>>
    %345 = vector.broadcast %344 : f32 to vector<8x32xf32>
    %346 = arith.mulf %345, %315 : vector<8x32xf32>
    %347 = arith.addf %314, %346 : vector<8x32xf32>
    %348 = vector.extract_strided_slice %281 {offsets = [0, 2], sizes = [8, 32], strides = [1, 1]} : vector<8x34xf32> to vector<8x32xf32>
    %c81 = arith.constant 81 : index
    %349 = memref.load %arg3[%c81] : memref<192xf32, #tpu.memory_space<smem>>
    %350 = vector.broadcast %349 : f32 to vector<8x32xf32>
    %351 = arith.mulf %350, %348 : vector<8x32xf32>
    %352 = arith.addf %319, %351 : vector<8x32xf32>
    %c85 = arith.constant 85 : index
    %353 = memref.load %arg3[%c85] : memref<192xf32, #tpu.memory_space<smem>>
    %354 = vector.broadcast %353 : f32 to vector<8x32xf32>
    %355 = arith.mulf %354, %348 : vector<8x32xf32>
    %356 = arith.addf %323, %355 : vector<8x32xf32>
    %c89 = arith.constant 89 : index
    %357 = memref.load %arg3[%c89] : memref<192xf32, #tpu.memory_space<smem>>
    %358 = vector.broadcast %357 : f32 to vector<8x32xf32>
    %359 = arith.mulf %358, %348 : vector<8x32xf32>
    %360 = arith.addf %327, %359 : vector<8x32xf32>
    %c93 = arith.constant 93 : index
    %361 = memref.load %arg3[%c93] : memref<192xf32, #tpu.memory_space<smem>>
    %362 = vector.broadcast %361 : f32 to vector<8x32xf32>
    %363 = arith.mulf %362, %348 : vector<8x32xf32>
    %364 = arith.addf %331, %363 : vector<8x32xf32>
    %c129 = arith.constant 129 : index
    %365 = memref.load %arg3[%c129] : memref<192xf32, #tpu.memory_space<smem>>
    %366 = vector.broadcast %365 : f32 to vector<8x32xf32>
    %367 = arith.mulf %366, %348 : vector<8x32xf32>
    %368 = arith.addf %335, %367 : vector<8x32xf32>
    %c133 = arith.constant 133 : index
    %369 = memref.load %arg3[%c133] : memref<192xf32, #tpu.memory_space<smem>>
    %370 = vector.broadcast %369 : f32 to vector<8x32xf32>
    %371 = arith.mulf %370, %348 : vector<8x32xf32>
    %372 = arith.addf %339, %371 : vector<8x32xf32>
    %c137 = arith.constant 137 : index
    %373 = memref.load %arg3[%c137] : memref<192xf32, #tpu.memory_space<smem>>
    %374 = vector.broadcast %373 : f32 to vector<8x32xf32>
    %375 = arith.mulf %374, %348 : vector<8x32xf32>
    %376 = arith.addf %343, %375 : vector<8x32xf32>
    %c141 = arith.constant 141 : index
    %377 = memref.load %arg3[%c141] : memref<192xf32, #tpu.memory_space<smem>>
    %378 = vector.broadcast %377 : f32 to vector<8x32xf32>
    %379 = arith.mulf %378, %348 : vector<8x32xf32>
    %380 = arith.addf %347, %379 : vector<8x32xf32>
    %c2_i32_24 = arith.constant 2 : i32
    %381 = arith.addi %1, %c2_i32_24 : i32
    %c0_25 = arith.constant 0 : index
    %c1_26 = arith.constant 1 : index
    %382 = arith.index_cast %381 : i32 to index
    %c0_27 = arith.constant 0 : index
    %383 = vector.load %arg2[%c0_25, %c1_26, %382, %c0_27] : memref<1x4x18x34xf32, #tpu.memory_space<vmem>>, vector<1x1x8x34xf32>
    %384 = vector.shape_cast %383 : vector<1x1x8x34xf32> to vector<8x34xf32>
    %385 = vector.extract_strided_slice %384 {offsets = [0, 0], sizes = [8, 32], strides = [1, 1]} : vector<8x34xf32> to vector<8x32xf32>
    %c145 = arith.constant 145 : index
    %386 = memref.load %arg3[%c145] : memref<192xf32, #tpu.memory_space<smem>>
    %387 = vector.broadcast %386 : f32 to vector<8x32xf32>
    %388 = arith.mulf %387, %385 : vector<8x32xf32>
    %389 = arith.addf %368, %388 : vector<8x32xf32>
    %c149 = arith.constant 149 : index
    %390 = memref.load %arg3[%c149] : memref<192xf32, #tpu.memory_space<smem>>
    %391 = vector.broadcast %390 : f32 to vector<8x32xf32>
    %392 = arith.mulf %391, %385 : vector<8x32xf32>
    %393 = arith.addf %372, %392 : vector<8x32xf32>
    %c153 = arith.constant 153 : index
    %394 = memref.load %arg3[%c153] : memref<192xf32, #tpu.memory_space<smem>>
    %395 = vector.broadcast %394 : f32 to vector<8x32xf32>
    %396 = arith.mulf %395, %385 : vector<8x32xf32>
    %397 = arith.addf %376, %396 : vector<8x32xf32>
    %c157 = arith.constant 157 : index
    %398 = memref.load %arg3[%c157] : memref<192xf32, #tpu.memory_space<smem>>
    %399 = vector.broadcast %398 : f32 to vector<8x32xf32>
    %400 = arith.mulf %399, %385 : vector<8x32xf32>
    %401 = arith.addf %380, %400 : vector<8x32xf32>
    %402 = vector.extract_strided_slice %384 {offsets = [0, 1], sizes = [8, 32], strides = [1, 1]} : vector<8x34xf32> to vector<8x32xf32>
    %c161 = arith.constant 161 : index
    %403 = memref.load %arg3[%c161] : memref<192xf32, #tpu.memory_space<smem>>
    %404 = vector.broadcast %403 : f32 to vector<8x32xf32>
    %405 = arith.mulf %404, %402 : vector<8x32xf32>
    %406 = arith.addf %389, %405 : vector<8x32xf32>
    %c165 = arith.constant 165 : index
    %407 = memref.load %arg3[%c165] : memref<192xf32, #tpu.memory_space<smem>>
    %408 = vector.broadcast %407 : f32 to vector<8x32xf32>
    %409 = arith.mulf %408, %402 : vector<8x32xf32>
    %410 = arith.addf %393, %409 : vector<8x32xf32>
    %c169 = arith.constant 169 : index
    %411 = memref.load %arg3[%c169] : memref<192xf32, #tpu.memory_space<smem>>
    %412 = vector.broadcast %411 : f32 to vector<8x32xf32>
    %413 = arith.mulf %412, %402 : vector<8x32xf32>
    %414 = arith.addf %397, %413 : vector<8x32xf32>
    %c173 = arith.constant 173 : index
    %415 = memref.load %arg3[%c173] : memref<192xf32, #tpu.memory_space<smem>>
    %416 = vector.broadcast %415 : f32 to vector<8x32xf32>
    %417 = arith.mulf %416, %402 : vector<8x32xf32>
    %418 = arith.addf %401, %417 : vector<8x32xf32>
    %419 = vector.extract_strided_slice %384 {offsets = [0, 2], sizes = [8, 32], strides = [1, 1]} : vector<8x34xf32> to vector<8x32xf32>
    %c177 = arith.constant 177 : index
    %420 = memref.load %arg3[%c177] : memref<192xf32, #tpu.memory_space<smem>>
    %421 = vector.broadcast %420 : f32 to vector<8x32xf32>
    %422 = arith.mulf %421, %419 : vector<8x32xf32>
    %423 = arith.addf %406, %422 : vector<8x32xf32>
    %c181 = arith.constant 181 : index
    %424 = memref.load %arg3[%c181] : memref<192xf32, #tpu.memory_space<smem>>
    %425 = vector.broadcast %424 : f32 to vector<8x32xf32>
    %426 = arith.mulf %425, %419 : vector<8x32xf32>
    %427 = arith.addf %410, %426 : vector<8x32xf32>
    %c185 = arith.constant 185 : index
    %428 = memref.load %arg3[%c185] : memref<192xf32, #tpu.memory_space<smem>>
    %429 = vector.broadcast %428 : f32 to vector<8x32xf32>
    %430 = arith.mulf %429, %419 : vector<8x32xf32>
    %431 = arith.addf %414, %430 : vector<8x32xf32>
    %c189 = arith.constant 189 : index
    %432 = memref.load %arg3[%c189] : memref<192xf32, #tpu.memory_space<smem>>
    %433 = vector.broadcast %432 : f32 to vector<8x32xf32>
    %434 = arith.mulf %433, %419 : vector<8x32xf32>
    %435 = arith.addf %418, %434 : vector<8x32xf32>
    %c0_i32_28 = arith.constant 0 : i32
    %436 = arith.addi %1, %c0_i32_28 : i32
    %c0_29 = arith.constant 0 : index
    %c2 = arith.constant 2 : index
    %437 = arith.index_cast %436 : i32 to index
    %c0_30 = arith.constant 0 : index
    %438 = vector.load %arg2[%c0_29, %c2, %437, %c0_30] : memref<1x4x18x34xf32, #tpu.memory_space<vmem>>, vector<1x1x8x34xf32>
    %439 = vector.shape_cast %438 : vector<1x1x8x34xf32> to vector<8x34xf32>
    %440 = vector.extract_strided_slice %439 {offsets = [0, 0], sizes = [8, 32], strides = [1, 1]} : vector<8x34xf32> to vector<8x32xf32>
    %c2_31 = arith.constant 2 : index
    %441 = memref.load %arg3[%c2_31] : memref<192xf32, #tpu.memory_space<smem>>
    %442 = vector.broadcast %441 : f32 to vector<8x32xf32>
    %443 = arith.mulf %442, %440 : vector<8x32xf32>
    %444 = arith.addf %352, %443 : vector<8x32xf32>
    %c6 = arith.constant 6 : index
    %445 = memref.load %arg3[%c6] : memref<192xf32, #tpu.memory_space<smem>>
    %446 = vector.broadcast %445 : f32 to vector<8x32xf32>
    %447 = arith.mulf %446, %440 : vector<8x32xf32>
    %448 = arith.addf %356, %447 : vector<8x32xf32>
    %c10 = arith.constant 10 : index
    %449 = memref.load %arg3[%c10] : memref<192xf32, #tpu.memory_space<smem>>
    %450 = vector.broadcast %449 : f32 to vector<8x32xf32>
    %451 = arith.mulf %450, %440 : vector<8x32xf32>
    %452 = arith.addf %360, %451 : vector<8x32xf32>
    %c14 = arith.constant 14 : index
    %453 = memref.load %arg3[%c14] : memref<192xf32, #tpu.memory_space<smem>>
    %454 = vector.broadcast %453 : f32 to vector<8x32xf32>
    %455 = arith.mulf %454, %440 : vector<8x32xf32>
    %456 = arith.addf %364, %455 : vector<8x32xf32>
    %457 = vector.extract_strided_slice %439 {offsets = [0, 1], sizes = [8, 32], strides = [1, 1]} : vector<8x34xf32> to vector<8x32xf32>
    %c18 = arith.constant 18 : index
    %458 = memref.load %arg3[%c18] : memref<192xf32, #tpu.memory_space<smem>>
    %459 = vector.broadcast %458 : f32 to vector<8x32xf32>
    %460 = arith.mulf %459, %457 : vector<8x32xf32>
    %461 = arith.addf %444, %460 : vector<8x32xf32>
    %c22 = arith.constant 22 : index
    %462 = memref.load %arg3[%c22] : memref<192xf32, #tpu.memory_space<smem>>
    %463 = vector.broadcast %462 : f32 to vector<8x32xf32>
    %464 = arith.mulf %463, %457 : vector<8x32xf32>
    %465 = arith.addf %448, %464 : vector<8x32xf32>
    %c26 = arith.constant 26 : index
    %466 = memref.load %arg3[%c26] : memref<192xf32, #tpu.memory_space<smem>>
    %467 = vector.broadcast %466 : f32 to vector<8x32xf32>
    %468 = arith.mulf %467, %457 : vector<8x32xf32>
    %469 = arith.addf %452, %468 : vector<8x32xf32>
    %c30 = arith.constant 30 : index
    %470 = memref.load %arg3[%c30] : memref<192xf32, #tpu.memory_space<smem>>
    %471 = vector.broadcast %470 : f32 to vector<8x32xf32>
    %472 = arith.mulf %471, %457 : vector<8x32xf32>
    %473 = arith.addf %456, %472 : vector<8x32xf32>
    %474 = vector.extract_strided_slice %439 {offsets = [0, 2], sizes = [8, 32], strides = [1, 1]} : vector<8x34xf32> to vector<8x32xf32>
    %c34 = arith.constant 34 : index
    %475 = memref.load %arg3[%c34] : memref<192xf32, #tpu.memory_space<smem>>
    %476 = vector.broadcast %475 : f32 to vector<8x32xf32>
    %477 = arith.mulf %476, %474 : vector<8x32xf32>
    %478 = arith.addf %461, %477 : vector<8x32xf32>
    %c38 = arith.constant 38 : index
    %479 = memref.load %arg3[%c38] : memref<192xf32, #tpu.memory_space<smem>>
    %480 = vector.broadcast %479 : f32 to vector<8x32xf32>
    %481 = arith.mulf %480, %474 : vector<8x32xf32>
    %482 = arith.addf %465, %481 : vector<8x32xf32>
    %c42 = arith.constant 42 : index
    %483 = memref.load %arg3[%c42] : memref<192xf32, #tpu.memory_space<smem>>
    %484 = vector.broadcast %483 : f32 to vector<8x32xf32>
    %485 = arith.mulf %484, %474 : vector<8x32xf32>
    %486 = arith.addf %469, %485 : vector<8x32xf32>
    %c46 = arith.constant 46 : index
    %487 = memref.load %arg3[%c46] : memref<192xf32, #tpu.memory_space<smem>>
    %488 = vector.broadcast %487 : f32 to vector<8x32xf32>
    %489 = arith.mulf %488, %474 : vector<8x32xf32>
    %490 = arith.addf %473, %489 : vector<8x32xf32>
    %c1_i32_32 = arith.constant 1 : i32
    %491 = arith.addi %1, %c1_i32_32 : i32
    %c0_33 = arith.constant 0 : index
    %c2_34 = arith.constant 2 : index
    %492 = arith.index_cast %491 : i32 to index
    %c0_35 = arith.constant 0 : index
    %493 = vector.load %arg2[%c0_33, %c2_34, %492, %c0_35] : memref<1x4x18x34xf32, #tpu.memory_space<vmem>>, vector<1x1x8x34xf32>
    %494 = vector.shape_cast %493 : vector<1x1x8x34xf32> to vector<8x34xf32>
    %495 = vector.extract_strided_slice %494 {offsets = [0, 0], sizes = [8, 32], strides = [1, 1]} : vector<8x34xf32> to vector<8x32xf32>
    %c50 = arith.constant 50 : index
    %496 = memref.load %arg3[%c50] : memref<192xf32, #tpu.memory_space<smem>>
    %497 = vector.broadcast %496 : f32 to vector<8x32xf32>
    %498 = arith.mulf %497, %495 : vector<8x32xf32>
    %499 = arith.addf %478, %498 : vector<8x32xf32>
    %c54 = arith.constant 54 : index
    %500 = memref.load %arg3[%c54] : memref<192xf32, #tpu.memory_space<smem>>
    %501 = vector.broadcast %500 : f32 to vector<8x32xf32>
    %502 = arith.mulf %501, %495 : vector<8x32xf32>
    %503 = arith.addf %482, %502 : vector<8x32xf32>
    %c58 = arith.constant 58 : index
    %504 = memref.load %arg3[%c58] : memref<192xf32, #tpu.memory_space<smem>>
    %505 = vector.broadcast %504 : f32 to vector<8x32xf32>
    %506 = arith.mulf %505, %495 : vector<8x32xf32>
    %507 = arith.addf %486, %506 : vector<8x32xf32>
    %c62 = arith.constant 62 : index
    %508 = memref.load %arg3[%c62] : memref<192xf32, #tpu.memory_space<smem>>
    %509 = vector.broadcast %508 : f32 to vector<8x32xf32>
    %510 = arith.mulf %509, %495 : vector<8x32xf32>
    %511 = arith.addf %490, %510 : vector<8x32xf32>
    %c98 = arith.constant 98 : index
    %512 = memref.load %arg3[%c98] : memref<192xf32, #tpu.memory_space<smem>>
    %513 = vector.broadcast %512 : f32 to vector<8x32xf32>
    %514 = arith.mulf %513, %495 : vector<8x32xf32>
    %515 = arith.addf %423, %514 : vector<8x32xf32>
    %c102 = arith.constant 102 : index
    %516 = memref.load %arg3[%c102] : memref<192xf32, #tpu.memory_space<smem>>
    %517 = vector.broadcast %516 : f32 to vector<8x32xf32>
    %518 = arith.mulf %517, %495 : vector<8x32xf32>
    %519 = arith.addf %427, %518 : vector<8x32xf32>
    %c106 = arith.constant 106 : index
    %520 = memref.load %arg3[%c106] : memref<192xf32, #tpu.memory_space<smem>>
    %521 = vector.broadcast %520 : f32 to vector<8x32xf32>
    %522 = arith.mulf %521, %495 : vector<8x32xf32>
    %523 = arith.addf %431, %522 : vector<8x32xf32>
    %c110 = arith.constant 110 : index
    %524 = memref.load %arg3[%c110] : memref<192xf32, #tpu.memory_space<smem>>
    %525 = vector.broadcast %524 : f32 to vector<8x32xf32>
    %526 = arith.mulf %525, %495 : vector<8x32xf32>
    %527 = arith.addf %435, %526 : vector<8x32xf32>
    %528 = vector.extract_strided_slice %494 {offsets = [0, 1], sizes = [8, 32], strides = [1, 1]} : vector<8x34xf32> to vector<8x32xf32>
    %c66 = arith.constant 66 : index
    %529 = memref.load %arg3[%c66] : memref<192xf32, #tpu.memory_space<smem>>
    %530 = vector.broadcast %529 : f32 to vector<8x32xf32>
    %531 = arith.mulf %530, %528 : vector<8x32xf32>
    %532 = arith.addf %499, %531 : vector<8x32xf32>
    %c70 = arith.constant 70 : index
    %533 = memref.load %arg3[%c70] : memref<192xf32, #tpu.memory_space<smem>>
    %534 = vector.broadcast %533 : f32 to vector<8x32xf32>
    %535 = arith.mulf %534, %528 : vector<8x32xf32>
    %536 = arith.addf %503, %535 : vector<8x32xf32>
    %c74 = arith.constant 74 : index
    %537 = memref.load %arg3[%c74] : memref<192xf32, #tpu.memory_space<smem>>
    %538 = vector.broadcast %537 : f32 to vector<8x32xf32>
    %539 = arith.mulf %538, %528 : vector<8x32xf32>
    %540 = arith.addf %507, %539 : vector<8x32xf32>
    %c78 = arith.constant 78 : index
    %541 = memref.load %arg3[%c78] : memref<192xf32, #tpu.memory_space<smem>>
    %542 = vector.broadcast %541 : f32 to vector<8x32xf32>
    %543 = arith.mulf %542, %528 : vector<8x32xf32>
    %544 = arith.addf %511, %543 : vector<8x32xf32>
    %c114 = arith.constant 114 : index
    %545 = memref.load %arg3[%c114] : memref<192xf32, #tpu.memory_space<smem>>
    %546 = vector.broadcast %545 : f32 to vector<8x32xf32>
    %547 = arith.mulf %546, %528 : vector<8x32xf32>
    %548 = arith.addf %515, %547 : vector<8x32xf32>
    %c118 = arith.constant 118 : index
    %549 = memref.load %arg3[%c118] : memref<192xf32, #tpu.memory_space<smem>>
    %550 = vector.broadcast %549 : f32 to vector<8x32xf32>
    %551 = arith.mulf %550, %528 : vector<8x32xf32>
    %552 = arith.addf %519, %551 : vector<8x32xf32>
    %c122 = arith.constant 122 : index
    %553 = memref.load %arg3[%c122] : memref<192xf32, #tpu.memory_space<smem>>
    %554 = vector.broadcast %553 : f32 to vector<8x32xf32>
    %555 = arith.mulf %554, %528 : vector<8x32xf32>
    %556 = arith.addf %523, %555 : vector<8x32xf32>
    %c126 = arith.constant 126 : index
    %557 = memref.load %arg3[%c126] : memref<192xf32, #tpu.memory_space<smem>>
    %558 = vector.broadcast %557 : f32 to vector<8x32xf32>
    %559 = arith.mulf %558, %528 : vector<8x32xf32>
    %560 = arith.addf %527, %559 : vector<8x32xf32>
    %561 = vector.extract_strided_slice %494 {offsets = [0, 2], sizes = [8, 32], strides = [1, 1]} : vector<8x34xf32> to vector<8x32xf32>
    %c82 = arith.constant 82 : index
    %562 = memref.load %arg3[%c82] : memref<192xf32, #tpu.memory_space<smem>>
    %563 = vector.broadcast %562 : f32 to vector<8x32xf32>
    %564 = arith.mulf %563, %561 : vector<8x32xf32>
    %565 = arith.addf %532, %564 : vector<8x32xf32>
    %c86 = arith.constant 86 : index
    %566 = memref.load %arg3[%c86] : memref<192xf32, #tpu.memory_space<smem>>
    %567 = vector.broadcast %566 : f32 to vector<8x32xf32>
    %568 = arith.mulf %567, %561 : vector<8x32xf32>
    %569 = arith.addf %536, %568 : vector<8x32xf32>
    %c90 = arith.constant 90 : index
    %570 = memref.load %arg3[%c90] : memref<192xf32, #tpu.memory_space<smem>>
    %571 = vector.broadcast %570 : f32 to vector<8x32xf32>
    %572 = arith.mulf %571, %561 : vector<8x32xf32>
    %573 = arith.addf %540, %572 : vector<8x32xf32>
    %c94 = arith.constant 94 : index
    %574 = memref.load %arg3[%c94] : memref<192xf32, #tpu.memory_space<smem>>
    %575 = vector.broadcast %574 : f32 to vector<8x32xf32>
    %576 = arith.mulf %575, %561 : vector<8x32xf32>
    %577 = arith.addf %544, %576 : vector<8x32xf32>
    %c130 = arith.constant 130 : index
    %578 = memref.load %arg3[%c130] : memref<192xf32, #tpu.memory_space<smem>>
    %579 = vector.broadcast %578 : f32 to vector<8x32xf32>
    %580 = arith.mulf %579, %561 : vector<8x32xf32>
    %581 = arith.addf %548, %580 : vector<8x32xf32>
    %c134 = arith.constant 134 : index
    %582 = memref.load %arg3[%c134] : memref<192xf32, #tpu.memory_space<smem>>
    %583 = vector.broadcast %582 : f32 to vector<8x32xf32>
    %584 = arith.mulf %583, %561 : vector<8x32xf32>
    %585 = arith.addf %552, %584 : vector<8x32xf32>
    %c138 = arith.constant 138 : index
    %586 = memref.load %arg3[%c138] : memref<192xf32, #tpu.memory_space<smem>>
    %587 = vector.broadcast %586 : f32 to vector<8x32xf32>
    %588 = arith.mulf %587, %561 : vector<8x32xf32>
    %589 = arith.addf %556, %588 : vector<8x32xf32>
    %c142 = arith.constant 142 : index
    %590 = memref.load %arg3[%c142] : memref<192xf32, #tpu.memory_space<smem>>
    %591 = vector.broadcast %590 : f32 to vector<8x32xf32>
    %592 = arith.mulf %591, %561 : vector<8x32xf32>
    %593 = arith.addf %560, %592 : vector<8x32xf32>
    %c2_i32_36 = arith.constant 2 : i32
    %594 = arith.addi %1, %c2_i32_36 : i32
    %c0_37 = arith.constant 0 : index
    %c2_38 = arith.constant 2 : index
    %595 = arith.index_cast %594 : i32 to index
    %c0_39 = arith.constant 0 : index
    %596 = vector.load %arg2[%c0_37, %c2_38, %595, %c0_39] : memref<1x4x18x34xf32, #tpu.memory_space<vmem>>, vector<1x1x8x34xf32>
    %597 = vector.shape_cast %596 : vector<1x1x8x34xf32> to vector<8x34xf32>
    %598 = vector.extract_strided_slice %597 {offsets = [0, 0], sizes = [8, 32], strides = [1, 1]} : vector<8x34xf32> to vector<8x32xf32>
    %c146 = arith.constant 146 : index
    %599 = memref.load %arg3[%c146] : memref<192xf32, #tpu.memory_space<smem>>
    %600 = vector.broadcast %599 : f32 to vector<8x32xf32>
    %601 = arith.mulf %600, %598 : vector<8x32xf32>
    %602 = arith.addf %581, %601 : vector<8x32xf32>
    %c150 = arith.constant 150 : index
    %603 = memref.load %arg3[%c150] : memref<192xf32, #tpu.memory_space<smem>>
    %604 = vector.broadcast %603 : f32 to vector<8x32xf32>
    %605 = arith.mulf %604, %598 : vector<8x32xf32>
    %606 = arith.addf %585, %605 : vector<8x32xf32>
    %c154 = arith.constant 154 : index
    %607 = memref.load %arg3[%c154] : memref<192xf32, #tpu.memory_space<smem>>
    %608 = vector.broadcast %607 : f32 to vector<8x32xf32>
    %609 = arith.mulf %608, %598 : vector<8x32xf32>
    %610 = arith.addf %589, %609 : vector<8x32xf32>
    %c158 = arith.constant 158 : index
    %611 = memref.load %arg3[%c158] : memref<192xf32, #tpu.memory_space<smem>>
    %612 = vector.broadcast %611 : f32 to vector<8x32xf32>
    %613 = arith.mulf %612, %598 : vector<8x32xf32>
    %614 = arith.addf %593, %613 : vector<8x32xf32>
    %615 = vector.extract_strided_slice %597 {offsets = [0, 1], sizes = [8, 32], strides = [1, 1]} : vector<8x34xf32> to vector<8x32xf32>
    %c162 = arith.constant 162 : index
    %616 = memref.load %arg3[%c162] : memref<192xf32, #tpu.memory_space<smem>>
    %617 = vector.broadcast %616 : f32 to vector<8x32xf32>
    %618 = arith.mulf %617, %615 : vector<8x32xf32>
    %619 = arith.addf %602, %618 : vector<8x32xf32>
    %c166 = arith.constant 166 : index
    %620 = memref.load %arg3[%c166] : memref<192xf32, #tpu.memory_space<smem>>
    %621 = vector.broadcast %620 : f32 to vector<8x32xf32>
    %622 = arith.mulf %621, %615 : vector<8x32xf32>
    %623 = arith.addf %606, %622 : vector<8x32xf32>
    %c170 = arith.constant 170 : index
    %624 = memref.load %arg3[%c170] : memref<192xf32, #tpu.memory_space<smem>>
    %625 = vector.broadcast %624 : f32 to vector<8x32xf32>
    %626 = arith.mulf %625, %615 : vector<8x32xf32>
    %627 = arith.addf %610, %626 : vector<8x32xf32>
    %c174 = arith.constant 174 : index
    %628 = memref.load %arg3[%c174] : memref<192xf32, #tpu.memory_space<smem>>
    %629 = vector.broadcast %628 : f32 to vector<8x32xf32>
    %630 = arith.mulf %629, %615 : vector<8x32xf32>
    %631 = arith.addf %614, %630 : vector<8x32xf32>
    %632 = vector.extract_strided_slice %597 {offsets = [0, 2], sizes = [8, 32], strides = [1, 1]} : vector<8x34xf32> to vector<8x32xf32>
    %c178 = arith.constant 178 : index
    %633 = memref.load %arg3[%c178] : memref<192xf32, #tpu.memory_space<smem>>
    %634 = vector.broadcast %633 : f32 to vector<8x32xf32>
    %635 = arith.mulf %634, %632 : vector<8x32xf32>
    %636 = arith.addf %619, %635 : vector<8x32xf32>
    %c182 = arith.constant 182 : index
    %637 = memref.load %arg3[%c182] : memref<192xf32, #tpu.memory_space<smem>>
    %638 = vector.broadcast %637 : f32 to vector<8x32xf32>
    %639 = arith.mulf %638, %632 : vector<8x32xf32>
    %640 = arith.addf %623, %639 : vector<8x32xf32>
    %c186 = arith.constant 186 : index
    %641 = memref.load %arg3[%c186] : memref<192xf32, #tpu.memory_space<smem>>
    %642 = vector.broadcast %641 : f32 to vector<8x32xf32>
    %643 = arith.mulf %642, %632 : vector<8x32xf32>
    %644 = arith.addf %627, %643 : vector<8x32xf32>
    %c190 = arith.constant 190 : index
    %645 = memref.load %arg3[%c190] : memref<192xf32, #tpu.memory_space<smem>>
    %646 = vector.broadcast %645 : f32 to vector<8x32xf32>
    %647 = arith.mulf %646, %632 : vector<8x32xf32>
    %648 = arith.addf %631, %647 : vector<8x32xf32>
    %c0_i32_40 = arith.constant 0 : i32
    %649 = arith.addi %1, %c0_i32_40 : i32
    %c0_41 = arith.constant 0 : index
    %c3 = arith.constant 3 : index
    %650 = arith.index_cast %649 : i32 to index
    %c0_42 = arith.constant 0 : index
    %651 = vector.load %arg2[%c0_41, %c3, %650, %c0_42] : memref<1x4x18x34xf32, #tpu.memory_space<vmem>>, vector<1x1x8x34xf32>
    %652 = vector.shape_cast %651 : vector<1x1x8x34xf32> to vector<8x34xf32>
    %653 = vector.extract_strided_slice %652 {offsets = [0, 0], sizes = [8, 32], strides = [1, 1]} : vector<8x34xf32> to vector<8x32xf32>
    %c3_43 = arith.constant 3 : index
    %654 = memref.load %arg3[%c3_43] : memref<192xf32, #tpu.memory_space<smem>>
    %655 = vector.broadcast %654 : f32 to vector<8x32xf32>
    %656 = arith.mulf %655, %653 : vector<8x32xf32>
    %657 = arith.addf %565, %656 : vector<8x32xf32>
    %c7 = arith.constant 7 : index
    %658 = memref.load %arg3[%c7] : memref<192xf32, #tpu.memory_space<smem>>
    %659 = vector.broadcast %658 : f32 to vector<8x32xf32>
    %660 = arith.mulf %659, %653 : vector<8x32xf32>
    %661 = arith.addf %569, %660 : vector<8x32xf32>
    %c11 = arith.constant 11 : index
    %662 = memref.load %arg3[%c11] : memref<192xf32, #tpu.memory_space<smem>>
    %663 = vector.broadcast %662 : f32 to vector<8x32xf32>
    %664 = arith.mulf %663, %653 : vector<8x32xf32>
    %665 = arith.addf %573, %664 : vector<8x32xf32>
    %c15 = arith.constant 15 : index
    %666 = memref.load %arg3[%c15] : memref<192xf32, #tpu.memory_space<smem>>
    %667 = vector.broadcast %666 : f32 to vector<8x32xf32>
    %668 = arith.mulf %667, %653 : vector<8x32xf32>
    %669 = arith.addf %577, %668 : vector<8x32xf32>
    %670 = vector.extract_strided_slice %652 {offsets = [0, 1], sizes = [8, 32], strides = [1, 1]} : vector<8x34xf32> to vector<8x32xf32>
    %c19 = arith.constant 19 : index
    %671 = memref.load %arg3[%c19] : memref<192xf32, #tpu.memory_space<smem>>
    %672 = vector.broadcast %671 : f32 to vector<8x32xf32>
    %673 = arith.mulf %672, %670 : vector<8x32xf32>
    %674 = arith.addf %657, %673 : vector<8x32xf32>
    %c23 = arith.constant 23 : index
    %675 = memref.load %arg3[%c23] : memref<192xf32, #tpu.memory_space<smem>>
    %676 = vector.broadcast %675 : f32 to vector<8x32xf32>
    %677 = arith.mulf %676, %670 : vector<8x32xf32>
    %678 = arith.addf %661, %677 : vector<8x32xf32>
    %c27 = arith.constant 27 : index
    %679 = memref.load %arg3[%c27] : memref<192xf32, #tpu.memory_space<smem>>
    %680 = vector.broadcast %679 : f32 to vector<8x32xf32>
    %681 = arith.mulf %680, %670 : vector<8x32xf32>
    %682 = arith.addf %665, %681 : vector<8x32xf32>
    %c31 = arith.constant 31 : index
    %683 = memref.load %arg3[%c31] : memref<192xf32, #tpu.memory_space<smem>>
    %684 = vector.broadcast %683 : f32 to vector<8x32xf32>
    %685 = arith.mulf %684, %670 : vector<8x32xf32>
    %686 = arith.addf %669, %685 : vector<8x32xf32>
    %687 = vector.extract_strided_slice %652 {offsets = [0, 2], sizes = [8, 32], strides = [1, 1]} : vector<8x34xf32> to vector<8x32xf32>
    %c35 = arith.constant 35 : index
    %688 = memref.load %arg3[%c35] : memref<192xf32, #tpu.memory_space<smem>>
    %689 = vector.broadcast %688 : f32 to vector<8x32xf32>
    %690 = arith.mulf %689, %687 : vector<8x32xf32>
    %691 = arith.addf %674, %690 : vector<8x32xf32>
    %c39 = arith.constant 39 : index
    %692 = memref.load %arg3[%c39] : memref<192xf32, #tpu.memory_space<smem>>
    %693 = vector.broadcast %692 : f32 to vector<8x32xf32>
    %694 = arith.mulf %693, %687 : vector<8x32xf32>
    %695 = arith.addf %678, %694 : vector<8x32xf32>
    %c43 = arith.constant 43 : index
    %696 = memref.load %arg3[%c43] : memref<192xf32, #tpu.memory_space<smem>>
    %697 = vector.broadcast %696 : f32 to vector<8x32xf32>
    %698 = arith.mulf %697, %687 : vector<8x32xf32>
    %699 = arith.addf %682, %698 : vector<8x32xf32>
    %c47 = arith.constant 47 : index
    %700 = memref.load %arg3[%c47] : memref<192xf32, #tpu.memory_space<smem>>
    %701 = vector.broadcast %700 : f32 to vector<8x32xf32>
    %702 = arith.mulf %701, %687 : vector<8x32xf32>
    %703 = arith.addf %686, %702 : vector<8x32xf32>
    %c1_i32_44 = arith.constant 1 : i32
    %704 = arith.addi %1, %c1_i32_44 : i32
    %c0_45 = arith.constant 0 : index
    %c3_46 = arith.constant 3 : index
    %705 = arith.index_cast %704 : i32 to index
    %c0_47 = arith.constant 0 : index
    %706 = vector.load %arg2[%c0_45, %c3_46, %705, %c0_47] : memref<1x4x18x34xf32, #tpu.memory_space<vmem>>, vector<1x1x8x34xf32>
    %707 = vector.shape_cast %706 : vector<1x1x8x34xf32> to vector<8x34xf32>
    %708 = vector.extract_strided_slice %707 {offsets = [0, 0], sizes = [8, 32], strides = [1, 1]} : vector<8x34xf32> to vector<8x32xf32>
    %c51 = arith.constant 51 : index
    %709 = memref.load %arg3[%c51] : memref<192xf32, #tpu.memory_space<smem>>
    %710 = vector.broadcast %709 : f32 to vector<8x32xf32>
    %711 = arith.mulf %710, %708 : vector<8x32xf32>
    %712 = arith.addf %691, %711 : vector<8x32xf32>
    %c55 = arith.constant 55 : index
    %713 = memref.load %arg3[%c55] : memref<192xf32, #tpu.memory_space<smem>>
    %714 = vector.broadcast %713 : f32 to vector<8x32xf32>
    %715 = arith.mulf %714, %708 : vector<8x32xf32>
    %716 = arith.addf %695, %715 : vector<8x32xf32>
    %c59 = arith.constant 59 : index
    %717 = memref.load %arg3[%c59] : memref<192xf32, #tpu.memory_space<smem>>
    %718 = vector.broadcast %717 : f32 to vector<8x32xf32>
    %719 = arith.mulf %718, %708 : vector<8x32xf32>
    %720 = arith.addf %699, %719 : vector<8x32xf32>
    %c63 = arith.constant 63 : index
    %721 = memref.load %arg3[%c63] : memref<192xf32, #tpu.memory_space<smem>>
    %722 = vector.broadcast %721 : f32 to vector<8x32xf32>
    %723 = arith.mulf %722, %708 : vector<8x32xf32>
    %724 = arith.addf %703, %723 : vector<8x32xf32>
    %c99 = arith.constant 99 : index
    %725 = memref.load %arg3[%c99] : memref<192xf32, #tpu.memory_space<smem>>
    %726 = vector.broadcast %725 : f32 to vector<8x32xf32>
    %727 = arith.mulf %726, %708 : vector<8x32xf32>
    %728 = arith.addf %636, %727 : vector<8x32xf32>
    %c103 = arith.constant 103 : index
    %729 = memref.load %arg3[%c103] : memref<192xf32, #tpu.memory_space<smem>>
    %730 = vector.broadcast %729 : f32 to vector<8x32xf32>
    %731 = arith.mulf %730, %708 : vector<8x32xf32>
    %732 = arith.addf %640, %731 : vector<8x32xf32>
    %c107 = arith.constant 107 : index
    %733 = memref.load %arg3[%c107] : memref<192xf32, #tpu.memory_space<smem>>
    %734 = vector.broadcast %733 : f32 to vector<8x32xf32>
    %735 = arith.mulf %734, %708 : vector<8x32xf32>
    %736 = arith.addf %644, %735 : vector<8x32xf32>
    %c111 = arith.constant 111 : index
    %737 = memref.load %arg3[%c111] : memref<192xf32, #tpu.memory_space<smem>>
    %738 = vector.broadcast %737 : f32 to vector<8x32xf32>
    %739 = arith.mulf %738, %708 : vector<8x32xf32>
    %740 = arith.addf %648, %739 : vector<8x32xf32>
    %741 = vector.extract_strided_slice %707 {offsets = [0, 1], sizes = [8, 32], strides = [1, 1]} : vector<8x34xf32> to vector<8x32xf32>
    %c67 = arith.constant 67 : index
    %742 = memref.load %arg3[%c67] : memref<192xf32, #tpu.memory_space<smem>>
    %743 = vector.broadcast %742 : f32 to vector<8x32xf32>
    %744 = arith.mulf %743, %741 : vector<8x32xf32>
    %745 = arith.addf %712, %744 : vector<8x32xf32>
    %c71 = arith.constant 71 : index
    %746 = memref.load %arg3[%c71] : memref<192xf32, #tpu.memory_space<smem>>
    %747 = vector.broadcast %746 : f32 to vector<8x32xf32>
    %748 = arith.mulf %747, %741 : vector<8x32xf32>
    %749 = arith.addf %716, %748 : vector<8x32xf32>
    %c75 = arith.constant 75 : index
    %750 = memref.load %arg3[%c75] : memref<192xf32, #tpu.memory_space<smem>>
    %751 = vector.broadcast %750 : f32 to vector<8x32xf32>
    %752 = arith.mulf %751, %741 : vector<8x32xf32>
    %753 = arith.addf %720, %752 : vector<8x32xf32>
    %c79 = arith.constant 79 : index
    %754 = memref.load %arg3[%c79] : memref<192xf32, #tpu.memory_space<smem>>
    %755 = vector.broadcast %754 : f32 to vector<8x32xf32>
    %756 = arith.mulf %755, %741 : vector<8x32xf32>
    %757 = arith.addf %724, %756 : vector<8x32xf32>
    %c115 = arith.constant 115 : index
    %758 = memref.load %arg3[%c115] : memref<192xf32, #tpu.memory_space<smem>>
    %759 = vector.broadcast %758 : f32 to vector<8x32xf32>
    %760 = arith.mulf %759, %741 : vector<8x32xf32>
    %761 = arith.addf %728, %760 : vector<8x32xf32>
    %c119 = arith.constant 119 : index
    %762 = memref.load %arg3[%c119] : memref<192xf32, #tpu.memory_space<smem>>
    %763 = vector.broadcast %762 : f32 to vector<8x32xf32>
    %764 = arith.mulf %763, %741 : vector<8x32xf32>
    %765 = arith.addf %732, %764 : vector<8x32xf32>
    %c123 = arith.constant 123 : index
    %766 = memref.load %arg3[%c123] : memref<192xf32, #tpu.memory_space<smem>>
    %767 = vector.broadcast %766 : f32 to vector<8x32xf32>
    %768 = arith.mulf %767, %741 : vector<8x32xf32>
    %769 = arith.addf %736, %768 : vector<8x32xf32>
    %c127 = arith.constant 127 : index
    %770 = memref.load %arg3[%c127] : memref<192xf32, #tpu.memory_space<smem>>
    %771 = vector.broadcast %770 : f32 to vector<8x32xf32>
    %772 = arith.mulf %771, %741 : vector<8x32xf32>
    %773 = arith.addf %740, %772 : vector<8x32xf32>
    %774 = vector.extract_strided_slice %707 {offsets = [0, 2], sizes = [8, 32], strides = [1, 1]} : vector<8x34xf32> to vector<8x32xf32>
    %c83 = arith.constant 83 : index
    %775 = memref.load %arg3[%c83] : memref<192xf32, #tpu.memory_space<smem>>
    %776 = vector.broadcast %775 : f32 to vector<8x32xf32>
    %777 = arith.mulf %776, %774 : vector<8x32xf32>
    %778 = arith.addf %745, %777 : vector<8x32xf32>
    %c87 = arith.constant 87 : index
    %779 = memref.load %arg3[%c87] : memref<192xf32, #tpu.memory_space<smem>>
    %780 = vector.broadcast %779 : f32 to vector<8x32xf32>
    %781 = arith.mulf %780, %774 : vector<8x32xf32>
    %782 = arith.addf %749, %781 : vector<8x32xf32>
    %c91 = arith.constant 91 : index
    %783 = memref.load %arg3[%c91] : memref<192xf32, #tpu.memory_space<smem>>
    %784 = vector.broadcast %783 : f32 to vector<8x32xf32>
    %785 = arith.mulf %784, %774 : vector<8x32xf32>
    %786 = arith.addf %753, %785 : vector<8x32xf32>
    %c95 = arith.constant 95 : index
    %787 = memref.load %arg3[%c95] : memref<192xf32, #tpu.memory_space<smem>>
    %788 = vector.broadcast %787 : f32 to vector<8x32xf32>
    %789 = arith.mulf %788, %774 : vector<8x32xf32>
    %790 = arith.addf %757, %789 : vector<8x32xf32>
    %c131 = arith.constant 131 : index
    %791 = memref.load %arg3[%c131] : memref<192xf32, #tpu.memory_space<smem>>
    %792 = vector.broadcast %791 : f32 to vector<8x32xf32>
    %793 = arith.mulf %792, %774 : vector<8x32xf32>
    %794 = arith.addf %761, %793 : vector<8x32xf32>
    %c135 = arith.constant 135 : index
    %795 = memref.load %arg3[%c135] : memref<192xf32, #tpu.memory_space<smem>>
    %796 = vector.broadcast %795 : f32 to vector<8x32xf32>
    %797 = arith.mulf %796, %774 : vector<8x32xf32>
    %798 = arith.addf %765, %797 : vector<8x32xf32>
    %c139 = arith.constant 139 : index
    %799 = memref.load %arg3[%c139] : memref<192xf32, #tpu.memory_space<smem>>
    %800 = vector.broadcast %799 : f32 to vector<8x32xf32>
    %801 = arith.mulf %800, %774 : vector<8x32xf32>
    %802 = arith.addf %769, %801 : vector<8x32xf32>
    %c143 = arith.constant 143 : index
    %803 = memref.load %arg3[%c143] : memref<192xf32, #tpu.memory_space<smem>>
    %804 = vector.broadcast %803 : f32 to vector<8x32xf32>
    %805 = arith.mulf %804, %774 : vector<8x32xf32>
    %806 = arith.addf %773, %805 : vector<8x32xf32>
    %c2_i32_48 = arith.constant 2 : i32
    %807 = arith.addi %1, %c2_i32_48 : i32
    %c0_49 = arith.constant 0 : index
    %c3_50 = arith.constant 3 : index
    %808 = arith.index_cast %807 : i32 to index
    %c0_51 = arith.constant 0 : index
    %809 = vector.load %arg2[%c0_49, %c3_50, %808, %c0_51] : memref<1x4x18x34xf32, #tpu.memory_space<vmem>>, vector<1x1x8x34xf32>
    %810 = vector.shape_cast %809 : vector<1x1x8x34xf32> to vector<8x34xf32>
    %811 = vector.extract_strided_slice %810 {offsets = [0, 0], sizes = [8, 32], strides = [1, 1]} : vector<8x34xf32> to vector<8x32xf32>
    %c147 = arith.constant 147 : index
    %812 = memref.load %arg3[%c147] : memref<192xf32, #tpu.memory_space<smem>>
    %813 = vector.broadcast %812 : f32 to vector<8x32xf32>
    %814 = arith.mulf %813, %811 : vector<8x32xf32>
    %815 = arith.addf %794, %814 : vector<8x32xf32>
    %c151 = arith.constant 151 : index
    %816 = memref.load %arg3[%c151] : memref<192xf32, #tpu.memory_space<smem>>
    %817 = vector.broadcast %816 : f32 to vector<8x32xf32>
    %818 = arith.mulf %817, %811 : vector<8x32xf32>
    %819 = arith.addf %798, %818 : vector<8x32xf32>
    %c155 = arith.constant 155 : index
    %820 = memref.load %arg3[%c155] : memref<192xf32, #tpu.memory_space<smem>>
    %821 = vector.broadcast %820 : f32 to vector<8x32xf32>
    %822 = arith.mulf %821, %811 : vector<8x32xf32>
    %823 = arith.addf %802, %822 : vector<8x32xf32>
    %c159 = arith.constant 159 : index
    %824 = memref.load %arg3[%c159] : memref<192xf32, #tpu.memory_space<smem>>
    %825 = vector.broadcast %824 : f32 to vector<8x32xf32>
    %826 = arith.mulf %825, %811 : vector<8x32xf32>
    %827 = arith.addf %806, %826 : vector<8x32xf32>
    %828 = vector.extract_strided_slice %810 {offsets = [0, 1], sizes = [8, 32], strides = [1, 1]} : vector<8x34xf32> to vector<8x32xf32>
    %c163 = arith.constant 163 : index
    %829 = memref.load %arg3[%c163] : memref<192xf32, #tpu.memory_space<smem>>
    %830 = vector.broadcast %829 : f32 to vector<8x32xf32>
    %831 = arith.mulf %830, %828 : vector<8x32xf32>
    %832 = arith.addf %815, %831 : vector<8x32xf32>
    %c167 = arith.constant 167 : index
    %833 = memref.load %arg3[%c167] : memref<192xf32, #tpu.memory_space<smem>>
    %834 = vector.broadcast %833 : f32 to vector<8x32xf32>
    %835 = arith.mulf %834, %828 : vector<8x32xf32>
    %836 = arith.addf %819, %835 : vector<8x32xf32>
    %c171 = arith.constant 171 : index
    %837 = memref.load %arg3[%c171] : memref<192xf32, #tpu.memory_space<smem>>
    %838 = vector.broadcast %837 : f32 to vector<8x32xf32>
    %839 = arith.mulf %838, %828 : vector<8x32xf32>
    %840 = arith.addf %823, %839 : vector<8x32xf32>
    %c175 = arith.constant 175 : index
    %841 = memref.load %arg3[%c175] : memref<192xf32, #tpu.memory_space<smem>>
    %842 = vector.broadcast %841 : f32 to vector<8x32xf32>
    %843 = arith.mulf %842, %828 : vector<8x32xf32>
    %844 = arith.addf %827, %843 : vector<8x32xf32>
    %845 = vector.extract_strided_slice %810 {offsets = [0, 2], sizes = [8, 32], strides = [1, 1]} : vector<8x34xf32> to vector<8x32xf32>
    %c179 = arith.constant 179 : index
    %846 = memref.load %arg3[%c179] : memref<192xf32, #tpu.memory_space<smem>>
    %847 = vector.broadcast %846 : f32 to vector<8x32xf32>
    %848 = arith.mulf %847, %845 : vector<8x32xf32>
    %849 = arith.addf %832, %848 : vector<8x32xf32>
    %c183 = arith.constant 183 : index
    %850 = memref.load %arg3[%c183] : memref<192xf32, #tpu.memory_space<smem>>
    %851 = vector.broadcast %850 : f32 to vector<8x32xf32>
    %852 = arith.mulf %851, %845 : vector<8x32xf32>
    %853 = arith.addf %836, %852 : vector<8x32xf32>
    %c187 = arith.constant 187 : index
    %854 = memref.load %arg3[%c187] : memref<192xf32, #tpu.memory_space<smem>>
    %855 = vector.broadcast %854 : f32 to vector<8x32xf32>
    %856 = arith.mulf %855, %845 : vector<8x32xf32>
    %857 = arith.addf %840, %856 : vector<8x32xf32>
    %c191 = arith.constant 191 : index
    %858 = memref.load %arg3[%c191] : memref<192xf32, #tpu.memory_space<smem>>
    %859 = vector.broadcast %858 : f32 to vector<8x32xf32>
    %860 = arith.mulf %859, %845 : vector<8x32xf32>
    %861 = arith.addf %844, %860 : vector<8x32xf32>
    %c0_52 = arith.constant 0 : index
    %862 = memref.load %arg4[%c0_52] : memref<4xf32, #tpu.memory_space<smem>>
    %863 = vector.broadcast %862 : f32 to vector<8x32xf32>
    %864 = arith.addf %778, %863 : vector<8x32xf32>
    %c0_53 = arith.constant 0 : index
    %c0_54 = arith.constant 0 : index
    %c0_55 = arith.constant 0 : index
    %c0_56 = arith.constant 0 : index
    %865 = vector.load %arg5[%c0_53, %c0_54, %c0_55, %c0_56] : memref<1x4x8x64xf32, #tpu.memory_space<vmem>>, vector<1x1x8x32xf32>
    %866 = vector.shape_cast %865 : vector<1x1x8x32xf32> to vector<8x32xf32>
    %867 = vector.shape_cast %864 : vector<8x32xf32> to vector<1x1x8x32xf32>
    tpu.vector_store %arg5[%c0_53, %c0_54, %c0_55, %c0_56], %867 {strides = array<i32>} : memref<1x4x8x64xf32, #tpu.memory_space<vmem>>, vector<1x1x8x32xf32>,
    %868 = vector.broadcast %862 : f32 to vector<8x32xf32>
    %869 = arith.addf %849, %868 : vector<8x32xf32>
    %c0_57 = arith.constant 0 : index
    %c0_58 = arith.constant 0 : index
    %c0_59 = arith.constant 0 : index
    %c32_60 = arith.constant 32 : index
    %870 = vector.load %arg5[%c0_57, %c0_58, %c0_59, %c32_60] : memref<1x4x8x64xf32, #tpu.memory_space<vmem>>, vector<1x1x8x32xf32>
    %871 = vector.shape_cast %870 : vector<1x1x8x32xf32> to vector<8x32xf32>
    %872 = vector.shape_cast %869 : vector<8x32xf32> to vector<1x1x8x32xf32>
    tpu.vector_store %arg5[%c0_57, %c0_58, %c0_59, %c32_60], %872 {strides = array<i32>} : memref<1x4x8x64xf32, #tpu.memory_space<vmem>>, vector<1x1x8x32xf32>,
    %c1_61 = arith.constant 1 : index
    %873 = memref.load %arg4[%c1_61] : memref<4xf32, #tpu.memory_space<smem>>
    %874 = vector.broadcast %873 : f32 to vector<8x32xf32>
    %875 = arith.addf %782, %874 : vector<8x32xf32>
    %c0_62 = arith.constant 0 : index
    %c1_63 = arith.constant 1 : index
    %c0_64 = arith.constant 0 : index
    %c0_65 = arith.constant 0 : index
    %876 = vector.load %arg5[%c0_62, %c1_63, %c0_64, %c0_65] : memref<1x4x8x64xf32, #tpu.memory_space<vmem>>, vector<1x1x8x32xf32>
    %877 = vector.shape_cast %876 : vector<1x1x8x32xf32> to vector<8x32xf32>
    %878 = vector.shape_cast %875 : vector<8x32xf32> to vector<1x1x8x32xf32>
    tpu.vector_store %arg5[%c0_62, %c1_63, %c0_64, %c0_65], %878 {strides = array<i32>} : memref<1x4x8x64xf32, #tpu.memory_space<vmem>>, vector<1x1x8x32xf32>,
    %879 = vector.broadcast %873 : f32 to vector<8x32xf32>
    %880 = arith.addf %853, %879 : vector<8x32xf32>
    %c0_66 = arith.constant 0 : index
    %c1_67 = arith.constant 1 : index
    %c0_68 = arith.constant 0 : index
    %c32_69 = arith.constant 32 : index
    %881 = vector.load %arg5[%c0_66, %c1_67, %c0_68, %c32_69] : memref<1x4x8x64xf32, #tpu.memory_space<vmem>>, vector<1x1x8x32xf32>
    %882 = vector.shape_cast %881 : vector<1x1x8x32xf32> to vector<8x32xf32>
    %883 = vector.shape_cast %880 : vector<8x32xf32> to vector<1x1x8x32xf32>
    tpu.vector_store %arg5[%c0_66, %c1_67, %c0_68, %c32_69], %883 {strides = array<i32>} : memref<1x4x8x64xf32, #tpu.memory_space<vmem>>, vector<1x1x8x32xf32>,
    %c2_70 = arith.constant 2 : index
    %884 = memref.load %arg4[%c2_70] : memref<4xf32, #tpu.memory_space<smem>>
    %885 = vector.broadcast %884 : f32 to vector<8x32xf32>
    %886 = arith.addf %786, %885 : vector<8x32xf32>
    %c0_71 = arith.constant 0 : index
    %c2_72 = arith.constant 2 : index
    %c0_73 = arith.constant 0 : index
    %c0_74 = arith.constant 0 : index
    %887 = vector.load %arg5[%c0_71, %c2_72, %c0_73, %c0_74] : memref<1x4x8x64xf32, #tpu.memory_space<vmem>>, vector<1x1x8x32xf32>
    %888 = vector.shape_cast %887 : vector<1x1x8x32xf32> to vector<8x32xf32>
    %889 = vector.shape_cast %886 : vector<8x32xf32> to vector<1x1x8x32xf32>
    tpu.vector_store %arg5[%c0_71, %c2_72, %c0_73, %c0_74], %889 {strides = array<i32>} : memref<1x4x8x64xf32, #tpu.memory_space<vmem>>, vector<1x1x8x32xf32>,
    %890 = vector.broadcast %884 : f32 to vector<8x32xf32>
    %891 = arith.addf %857, %890 : vector<8x32xf32>
    %c0_75 = arith.constant 0 : index
    %c2_76 = arith.constant 2 : index
    %c0_77 = arith.constant 0 : index
    %c32_78 = arith.constant 32 : index
    %892 = vector.load %arg5[%c0_75, %c2_76, %c0_77, %c32_78] : memref<1x4x8x64xf32, #tpu.memory_space<vmem>>, vector<1x1x8x32xf32>
    %893 = vector.shape_cast %892 : vector<1x1x8x32xf32> to vector<8x32xf32>
    %894 = vector.shape_cast %891 : vector<8x32xf32> to vector<1x1x8x32xf32>
    tpu.vector_store %arg5[%c0_75, %c2_76, %c0_77, %c32_78], %894 {strides = array<i32>} : memref<1x4x8x64xf32, #tpu.memory_space<vmem>>, vector<1x1x8x32xf32>,
    %c3_79 = arith.constant 3 : index
    %895 = memref.load %arg4[%c3_79] : memref<4xf32, #tpu.memory_space<smem>>
    %896 = vector.broadcast %895 : f32 to vector<8x32xf32>
    %897 = arith.addf %790, %896 : vector<8x32xf32>
    %c0_80 = arith.constant 0 : index
    %c3_81 = arith.constant 3 : index
    %c0_82 = arith.constant 0 : index
    %c0_83 = arith.constant 0 : index
    %898 = vector.load %arg5[%c0_80, %c3_81, %c0_82, %c0_83] : memref<1x4x8x64xf32, #tpu.memory_space<vmem>>, vector<1x1x8x32xf32>
    %899 = vector.shape_cast %898 : vector<1x1x8x32xf32> to vector<8x32xf32>
    %900 = vector.shape_cast %897 : vector<8x32xf32> to vector<1x1x8x32xf32>
    tpu.vector_store %arg5[%c0_80, %c3_81, %c0_82, %c0_83], %900 {strides = array<i32>} : memref<1x4x8x64xf32, #tpu.memory_space<vmem>>, vector<1x1x8x32xf32>,
    %901 = vector.broadcast %895 : f32 to vector<8x32xf32>
    %902 = arith.addf %861, %901 : vector<8x32xf32>
    %c0_84 = arith.constant 0 : index
    %c3_85 = arith.constant 3 : index
    %c0_86 = arith.constant 0 : index
    %c32_87 = arith.constant 32 : index
    %903 = vector.load %arg5[%c0_84, %c3_85, %c0_86, %c32_87] : memref<1x4x8x64xf32, #tpu.memory_space<vmem>>, vector<1x1x8x32xf32>
    %904 = vector.shape_cast %903 : vector<1x1x8x32xf32> to vector<8x32xf32>
    %905 = vector.shape_cast %902 : vector<8x32xf32> to vector<1x1x8x32xf32>
    tpu.vector_store %arg5[%c0_84, %c3_85, %c0_86, %c32_87], %905 {strides = array<i32>} : memref<1x4x8x64xf32, #tpu.memory_space<vmem>>, vector<1x1x8x32xf32>,
    return
  }
  func.func @transform_0(%arg0: i32, %arg1: i32) -> (i32, i32, i32, i32) {
    %c0_i32 = arith.constant 0 : i32
    %c0_i32_0 = arith.constant 0 : i32
    %c0_i32_1 = arith.constant 0 : i32
    %c0_i32_2 = arith.constant 0 : i32
    return %arg0, %c0_i32, %c0_i32_0, %c0_i32_1 : i32, i32, i32, i32
  }
  func.func @transform_1(%arg0: i32, %arg1: i32) -> i32 {
    %c0_i32 = arith.constant 0 : i32
    %c0_i32_0 = arith.constant 0 : i32
    return %c0_i32 : i32
  }
  func.func @transform_2(%arg0: i32, %arg1: i32) -> i32 {
    %c0_i32 = arith.constant 0 : i32
    %c0_i32_0 = arith.constant 0 : i32
    return %c0_i32 : i32
  }
  func.func @transform_3(%arg0: i32, %arg1: i32) -> (i32, i32, i32, i32) {
    %c0_i32 = arith.constant 0 : i32
    %c0_i32_0 = arith.constant 0 : i32
    %c0_i32_1 = arith.constant 0 : i32
    return %arg0, %c0_i32, %arg1, %c0_i32_0 : i32, i32, i32, i32
  }
}

</mosaic_0001>

<llo_original>
// kernel: tpu_custom_call.1
$region0: #{tpu_custom_call.1}
  #allocation0 [shape = 'u32[]', space=smem, size = 0x4, offset = 0x4, fixed_abs, tag = 'smem constant byte address 0x4 - core index']
  #allocation1 [shape = 'u32[72,128]{1,0:T(1,128)}', space=vmem, size = 0x9000, scoped, tag = 'internal scratch']
  %s0 = inlined_call_operand.vmem [shape: f32[2,4,18,34], index: 0, kind: input, shape index: {}]
  %s1 = inlined_call_operand.vmem [shape: f32[192], index: 1, kind: input, shape index: {}]
  %s2 = inlined_call_operand.vmem [shape: f32[4], index: 2, kind: input, shape index: {}]
  %s3 = inlined_call_operand.hbm [shape: f32[2,4,16,64], index: 3, kind: output, shape index: {}]
  %s4 = sld [smem:[#allocation0]]
  $region53: #{tpu_custom_call.1} parent=0
    _
  %s6 = ssub.s32 1, %s4
  %s7 = scalar_select 0, %s6, %s4
  $region1: #{tpu_custom_call.1} parent=0
    #allocation2 [shape = 'u8[1024]{0}', space=smem, size = 0x400, scoped, tag = 'input window, operand 1, single buffered']
    #allocation3 [shape = 's32[2]{0}', space=sflag, size = 0x8, scoped, tag = 'scoped memory for tpu_custom_call.1']
    #allocation4 [shape = 's32[2]{0}', space=sflag, size = 0x8, scoped, tag = 'scoped memory for tpu_custom_call.1']
    #allocation5 [shape = 'u8[512]{0}', space=smem, size = 0x200, scoped, tag = 'input window, operand 2, single buffered']
    #allocation6 [shape = 's32[1]{0}', space=sflag, size = 0x4, scoped, tag = 'scoped memory for tpu_custom_call.1']
    #allocation7 [shape = 'u8[32768]{0}', space=vmem, size = 0x8000, scoped, tag = 'output window, operand 0']
    %8 = vsyncpa [#allocation4], 0
    %9 = vsyncpa [#allocation6], 0
    %10 = vsyncpa [#allocation3], 0
    %s11 = scalar_lea.sflag [#allocation3], 1
    %12 = vsyncpa %s11, 0
    loop: start=0, step=1, limit=6
    $region2: #{tpu_custom_call.1} parent=1 // loop_pre_header
      _
    $region3: #{tpu_custom_call.1} parent=1 // loop_header
      %s14 = sphi 0, %s18
      %p15 = scmp.ge.s32.totalorder %s14, 6
      %s21 = sphi 0, %s33
      %s22 = sphi 0, %s29
      %s23 = sphi 0, %s21
      %s24 = sphi 0, %s22
      %s25 = sphi 0, %s23
      %s26 = sphi 0, %s24
      %s36 = sphi 0, %s38
      %s39 = sphi 0, %s36
      %s40 = sphi 0, %s39
      %s56 = sphi 0, %s40
      %s60 = sphi 0, %s60
      %s62 = sphi 0, %s60
      %s63 = sphi 0, %s62
      %s77 = sphi 0, %s63
      %s81 = sphi 0, %s81
      %s83 = sphi 0, %s81
      %s84 = sphi 0, %s83
      %s98 = sphi 0, %s84
      %s106 = sphi 0, %s108
      %s109 = sphi 0, %s106
      %s110 = sphi 0, %s109
      %s126 = sphi 0, %s110
    $region4: #{tpu_custom_call.1} parent=1 // loop_header_branch
      %17 = sbr.rel (%p15) target = $region8
    $region5: #{tpu_custom_call.1} parent=1 // loop_body
      %s19 = ssub.s32 %s14, 1
      %s20 = ssub.s32 %s14, 2
      %s27 = sadd.s32 1, %s22
      %p28 = scmp.ge.s32.totalorder %s27, 2
      %s29 = scalar_select %p28, 0, %s27
      %s30 = sadd.s32 1, %s21
      %s31 = scalar_select %p28, %s30, %s21
      %p32 = scmp.ge.s32.totalorder %s31, 2
      %s33 = scalar_select %p32, 0, %s31
      %s34 = ssub.s32 %s21, %s33
      %p35 = scmp.eq.s32.totalorder %s34, 0
      %s37 = sadd.s32 %s36, 1
      %s38 = scalar_select %p35, %s36, %s37
      %p41 = pneg %p35
      %p42 = scmp.eq.s32.totalorder %s14, 3
      %p43 = por %p41, %p42
      %p44 = scmp.ne.s32.totalorder %s36, %s39
      %p45 = scmp.eq.s32.totalorder %s14, 0
      %p46 = por %p44, %p45
      %p47 = scmp.ne.s32.totalorder %s36, %s39
      %p48 = scmp.eq.s32.totalorder %s19, 3
      %p49 = por %p47, %p48
      %p50 = scmp.ne.s32.totalorder %s39, %s40
      %p51 = scmp.eq.s32.totalorder %s19, 0
      %p52 = por %p50, %p51
      %p53 = scmp.ne.s32.totalorder %s39, %s40
      %p54 = scmp.eq.s32.totalorder %s20, 3
      %p55 = por %p53, %p54
      %p57 = scmp.ne.s32.totalorder %s40, %s56
      %p58 = scmp.eq.s32.totalorder %s20, 0
      %p59 = por %p57, %p58
      %s61 = sadd.s32 %s60, 1
      %p64 = scmp.eq.s32.totalorder %s14, 3
      %p65 = scmp.ne.s32.totalorder %s60, %s62
      %p66 = scmp.eq.s32.totalorder %s14, 0
      %p67 = por %p65, %p66
      %p68 = scmp.ne.s32.totalorder %s60, %s62
      %p69 = scmp.eq.s32.totalorder %s19, 3
      %p70 = por %p68, %p69
      %p71 = scmp.ne.s32.totalorder %s62, %s63
      %p72 = scmp.eq.s32.totalorder %s19, 0
      %p73 = por %p71, %p72
      %p74 = scmp.ne.s32.totalorder %s62, %s63
      %p75 = scmp.eq.s32.totalorder %s20, 3
      %p76 = por %p74, %p75
      %p78 = scmp.ne.s32.totalorder %s63, %s77
      %p79 = scmp.eq.s32.totalorder %s20, 0
      %p80 = por %p78, %p79
      %s82 = sadd.s32 %s81, 1
      %p85 = scmp.eq.s32.totalorder %s14, 3
      %p86 = scmp.ne.s32.totalorder %s81, %s83
      %p87 = scmp.eq.s32.totalorder %s14, 0
      %p88 = por %p86, %p87
      %p89 = scmp.ne.s32.totalorder %s81, %s83
      %p90 = scmp.eq.s32.totalorder %s19, 3
      %p91 = por %p89, %p90
      %p92 = scmp.ne.s32.totalorder %s83, %s84
      %p93 = scmp.eq.s32.totalorder %s19, 0
      %p94 = por %p92, %p93
      %p95 = scmp.ne.s32.totalorder %s83, %s84
      %p96 = scmp.eq.s32.totalorder %s20, 3
      %p97 = por %p95, %p96
      %p99 = scmp.ne.s32.totalorder %s84, %s98
      %p100 = scmp.eq.s32.totalorder %s20, 0
      %p101 = por %p99, %p100
      %s102 = ssub.s32 %s21, %s33
      %s103 = ssub.s32 %s22, %s29
      %s104 = sor.u32 %s102, %s103
      %p105 = scmp.eq.s32.totalorder %s104, 0
      %s107 = sadd.s32 %s106, 1
      %s108 = scalar_select %p105, %s106, %s107
      %p111 = pneg %p105
      %p112 = scmp.eq.s32.totalorder %s14, 3
      %p113 = por %p111, %p112
      %p114 = scmp.ne.s32.totalorder %s106, %s109
      %p115 = scmp.eq.s32.totalorder %s14, 0
      %p116 = por %p114, %p115
      %p117 = scmp.ne.s32.totalorder %s106, %s109
      %p118 = scmp.eq.s32.totalorder %s19, 3
      %p119 = por %p117, %p118
      %p120 = scmp.ne.s32.totalorder %s109, %s110
      %p121 = scmp.eq.s32.totalorder %s19, 0
      %p122 = por %p120, %p121
      %p123 = scmp.ne.s32.totalorder %s109, %s110
      %p124 = scmp.eq.s32.totalorder %s20, 3
      %p125 = por %p123, %p124
      %p127 = scmp.ne.s32.totalorder %s110, %s126
      %p128 = scmp.eq.s32.totalorder %s20, 0
      %p129 = por %p127, %p128
      %p130 = scmp.le.s32.totalorder 1, %s14
      %p131 = scmp.lt.s32.totalorder %s14, 5
      %p132 = pnand %p130, %p131
      %p133 = pneg %p132
      // Predicated region
      $region9: #{tpu_custom_call.1} parent=5 // pred_check
        _
      $region10: #{tpu_custom_call.1} parent=5 // pred_check_branch
        %135 = sbr.rel (%p132) target = $region12
      $region11: #{tpu_custom_call.1} parent=5 // pred_region
        %s136 = ssub.s32 %s14, 1
        // Predicated region
        $region13: #{tpu_custom_call.1} parent=11 // pred_check
          %p137 = pneg %p73
        $region14: #{tpu_custom_call.1} parent=11 // pred_check_branch
          %139 = sbr.rel (%p137) target = $region16
        $region15: #{tpu_custom_call.1} parent=11 // pred_region
          %141 = vsyncadd [#allocation4], 0
          %s143 = sshll.u32 %s1, 4
          %s144 = int_to_ptr.vmem [resolvable:$true] %s143
          %146 = dma.vmem_to_smem %s144, 32, [#allocation2], [#allocation4]
        $region16: #{tpu_custom_call.1} parent=11 // pred_fallthru
          _
        // Predicated region
        $region17: #{tpu_custom_call.1} parent=11 // pred_check
          %p147 = pneg %p94
        $region18: #{tpu_custom_call.1} parent=11 // pred_check_branch
          %149 = sbr.rel (%p147) target = $region20
        $region19: #{tpu_custom_call.1} parent=11 // pred_region
          %151 = vsyncadd [#allocation6], 0
          %s153 = sshll.u32 %s2, 4
          %s154 = int_to_ptr.vmem [resolvable:$true] %s153
          %156 = dma.vmem_to_smem %s154, 16, [#allocation5], [#allocation6]
        $region20: #{tpu_custom_call.1} parent=11 // pred_fallthru
          _
      $region12: #{tpu_custom_call.1} parent=5 // pred_fallthru
        _
      %p157 = scmp.lt.s32.totalorder %s14, 4
      // Predicated region
      $region21: #{tpu_custom_call.1} parent=5 // pred_check
        %p158 = pneg %p157
      $region22: #{tpu_custom_call.1} parent=5 // pred_check_branch
        %160 = sbr.rel (%p158) target = $region24
      $region23: #{tpu_custom_call.1} parent=5 // pred_region
        // Predicated region
        $region25: #{tpu_custom_call.1} parent=23 // pred_check
          %p161 = pneg %p46
        $region26: #{tpu_custom_call.1} parent=23 // pred_check_branch
          %163 = sbr.rel (%p161) target = $region28
        $region27: #{tpu_custom_call.1} parent=23 // pred_region
          %p164 = scmp.lt.s32.totalorder %s21, 1
          %s165 = scalar_select %p164, %s21, 1
          %s166 = smul.addr %s165, 12
          %s167 = smul.addr %s166, 8
          %s168 = scalar_lea.vmem %s0, %s167
        $region28: #{tpu_custom_call.1} parent=23 // pred_fallthru
          _
      $region24: #{tpu_custom_call.1} parent=5 // pred_fallthru
        _
      %p169 = scmp.le.s32.totalorder 1, %s14
      %p170 = scmp.lt.s32.totalorder %s14, 5
      %p171 = pnand %p169, %p170
      %p172 = pneg %p171
      // Predicated region
      $region29: #{tpu_custom_call.1} parent=5 // pred_check
        _
      $region30: #{tpu_custom_call.1} parent=5 // pred_check_branch
        %174 = sbr.rel (%p171) target = $region32
      $region31: #{tpu_custom_call.1} parent=5 // pred_region
        %s175 = ssub.s32 %s14, 1
        // Predicated region
        $region33: #{tpu_custom_call.1} parent=31 // pred_check
          %p176 = pneg %p73
        $region34: #{tpu_custom_call.1} parent=31 // pred_check_branch
          %178 = sbr.rel (%p176) target = $region36
        $region35: #{tpu_custom_call.1} parent=31 // pred_region
          %180 = dma.done [#allocation4], 32
        $region36: #{tpu_custom_call.1} parent=31 // pred_fallthru
          _
        // Predicated region
        $region37: #{tpu_custom_call.1} parent=31 // pred_check
          %p181 = pneg %p94
        $region38: #{tpu_custom_call.1} parent=31 // pred_check_branch
          %183 = sbr.rel (%p181) target = $region40
        $region39: #{tpu_custom_call.1} parent=31 // pred_region
          %185 = dma.done [#allocation6], 16
        $region40: #{tpu_custom_call.1} parent=31 // pred_fallthru
          _
        %186 = sfence
        %p187 = scmp.lt.s32.totalorder %s23, 1
        %s188 = scalar_select %p187, %s23, 1
        %s189 = smul.addr %s188, 12
        %s190 = smul.addr %s189, 8
        %s191 = scalar_lea.vmem %s0, %s190
        %p192 = pneg %p52
        %p193 = pneg %p49
        %p194 = pneg %p73
        %p195 = pneg %p70
        %p196 = pneg %p94
        %p197 = pneg %p91
        %p198 = pneg %p122
        %p199 = pneg %p119
        %s200 = sand.u32 %s109, 1
        %s201 = scalar_lea.sflag [#allocation3], %s200
        %s202 = sand.u32 %s109, 1
        %s203 = smul.addr %s202, 32
        %s204 = scalar_lea.vmem [#allocation7], %s203
        %p205 = scmp.lt.s32.totalorder %s23, 1
        %s206 = scalar_select %p205, %s23, 1
        %s207 = smul.addr %s206, 12
        %s208 = smul.addr %s207, 8
        %s209 = scalar_lea.vmem %s0, %s208
        %s210 = smul.u32 %s24, 8
        %s211 = scalar_lea.vmem %s209, %s210
        %v212 = vld [vmem:[%s211] sm:$0xff]
        %s213 = sld [smem:[#allocation2]]
        %v214 = vstv %s213
        %v215 = vmul.f32 %v214, %v212
        %v216 = vadd.f32 %v215, 0.0
        %s217 = sld [smem:[#allocation2 + $0x4]]
        %v218 = vstv %s217
        %v219 = vmul.f32 %v218, %v212
        %v220 = vadd.f32 %v219, 0.0
        %s221 = sld [smem:[#allocation2 + $0x8]]
        %v222 = vstv %s221
        %v223 = vmul.f32 %v222, %v212
        %v224 = vadd.f32 %v223, 0.0
        %s225 = sld [smem:[#allocation2 + $0xc]]
        %v226 = vstv %s225
        %v227 = vmul.f32 %v226, %v212
        %v228 = vadd.f32 %v227, 0.0
        %s229 = sld [smem:[#allocation2 + $0x10]]
        %v230 = vstv %s229
        %v231 = vmul.f32 %v230, %v212
        %233 = vrot.lane.b32.xlu0 %v231, 127
        %v234 = vpop.permute.xlu0 %233
        %v236 = vadd.f32 %v216, %v234
        %s237 = sld [smem:[#allocation2 + $0x14]]
        %v238 = vstv %s237
        %v239 = vmul.f32 %v238, %v212
        %241 = vrot.lane.b32.xlu0 %v239, 127
        %v242 = vpop.permute.xlu0 %241
        %v244 = vadd.f32 %v220, %v242
        %s245 = sld [smem:[#allocation2 + $0x18]]
        %v246 = vstv %s245
        %v247 = vmul.f32 %v246, %v212
        %249 = vrot.lane.b32.xlu0 %v247, 127
        %v250 = vpop.permute.xlu0 %249
        %v252 = vadd.f32 %v224, %v250
        %s253 = sld [smem:[#allocation2 + $0x1c]]
        %v254 = vstv %s253
        %v255 = vmul.f32 %v254, %v212
        %257 = vrot.lane.b32.xlu0 %v255, 127
        %v258 = vpop.permute.xlu0 %257
        %v260 = vadd.f32 %v228, %v258
        %s261 = sld [smem:[#allocation2 + $0x20]]
        %v262 = vstv %s261
        %v263 = vmul.f32 %v262, %v212
        %265 = vrot.lane.b32.xlu0 %v263, 126
        %v266 = vpop.permute.xlu0 %265
        %v268 = vadd.f32 %v236, %v266
        %s269 = sld [smem:[#allocation2 + $0x24]]
        %v270 = vstv %s269
        %v271 = vmul.f32 %v270, %v212
        %273 = vrot.lane.b32.xlu0 %v271, 126
        %v274 = vpop.permute.xlu0 %273
        %v276 = vadd.f32 %v244, %v274
        %s277 = sld [smem:[#allocation2 + $0x28]]
        %v278 = vstv %s277
        %v279 = vmul.f32 %v278, %v212
        %281 = vrot.lane.b32.xlu0 %v279, 126
        %v282 = vpop.permute.xlu0 %281
        %v284 = vadd.f32 %v252, %v282
        %s285 = sld [smem:[#allocation2 + $0x2c]]
        %v286 = vstv %s285
        %v287 = vmul.f32 %v286, %v212
        %289 = vrot.lane.b32.xlu0 %v287, 126
        %v290 = vpop.permute.xlu0 %289
        %v292 = vadd.f32 %v260, %v290
        %s293 = sadd.s32 %s210, 1
        %s294 = scalar_lea.vmem %s209, %s293
        %v295 = vld [vmem:[%s294] sm:$0xff]
        %s296 = sld [smem:[#allocation2 + $0x30]]
        %v297 = vstv %s296
        %v298 = vmul.f32 %v297, %v295
        %v299 = vadd.f32 %v268, %v298
        %s300 = sld [smem:[#allocation2 + $0x34]]
        %v301 = vstv %s300
        %v302 = vmul.f32 %v301, %v295
        %v303 = vadd.f32 %v276, %v302
        %s304 = sld [smem:[#allocation2 + $0x38]]
        %v305 = vstv %s304
        %v306 = vmul.f32 %v305, %v295
        %v307 = vadd.f32 %v284, %v306
        %s308 = sld [smem:[#allocation2 + $0x3c]]
        %v309 = vstv %s308
        %v310 = vmul.f32 %v309, %v295
        %v311 = vadd.f32 %v292, %v310
        %s312 = sld [smem:[#allocation2 + $0x60]]
        %v313 = vstv %s312
        %v314 = vmul.f32 %v313, %v295
        %v315 = vadd.f32 %v314, 0.0
        %s316 = sld [smem:[#allocation2 + $0x64]]
        %v317 = vstv %s316
        %v318 = vmul.f32 %v317, %v295
        %v319 = vadd.f32 %v318, 0.0
        %s320 = sld [smem:[#allocation2 + $0x68]]
        %v321 = vstv %s320
        %v322 = vmul.f32 %v321, %v295
        %v323 = vadd.f32 %v322, 0.0
        %s324 = sld [smem:[#allocation2 + $0x6c]]
        %v325 = vstv %s324
        %v326 = vmul.f32 %v325, %v295
        %v327 = vadd.f32 %v326, 0.0
        %s328 = sld [smem:[#allocation2 + $0x40]]
        %v329 = vstv %s328
        %v330 = vmul.f32 %v329, %v295
        %332 = vrot.lane.b32.xlu0 %v330, 127
        %v333 = vpop.permute.xlu0 %332
        %v335 = vadd.f32 %v299, %v333
        %s336 = sld [smem:[#allocation2 + $0x44]]
        %v337 = vstv %s336
        %v338 = vmul.f32 %v337, %v295
        %340 = vrot.lane.b32.xlu0 %v338, 127
        %v341 = vpop.permute.xlu0 %340
        %v343 = vadd.f32 %v303, %v341
        %s344 = sld [smem:[#allocation2 + $0x48]]
        %v345 = vstv %s344
        %v346 = vmul.f32 %v345, %v295
        %348 = vrot.lane.b32.xlu0 %v346, 127
        %v349 = vpop.permute.xlu0 %348
        %v351 = vadd.f32 %v307, %v349
        %s352 = sld [smem:[#allocation2 + $0x4c]]
        %v353 = vstv %s352
        %v354 = vmul.f32 %v353, %v295
        %356 = vrot.lane.b32.xlu0 %v354, 127
        %v357 = vpop.permute.xlu0 %356
        %v359 = vadd.f32 %v311, %v357
        %s360 = sld [smem:[#allocation2 + $0x70]]
        %v361 = vstv %s360
        %v362 = vmul.f32 %v361, %v295
        %364 = vrot.lane.b32.xlu0 %v362, 127
        %v365 = vpop.permute.xlu0 %364
        %v367 = vadd.f32 %v315, %v365
        %s368 = sld [smem:[#allocation2 + $0x74]]
        %v369 = vstv %s368
        %v370 = vmul.f32 %v369, %v295
        %372 = vrot.lane.b32.xlu0 %v370, 127
        %v373 = vpop.permute.xlu0 %372
        %v375 = vadd.f32 %v319, %v373
        %s376 = sld [smem:[#allocation2 + $0x78]]
        %v377 = vstv %s376
        %v378 = vmul.f32 %v377, %v295
        %380 = vrot.lane.b32.xlu0 %v378, 127
        %v381 = vpop.permute.xlu0 %380
        %v383 = vadd.f32 %v323, %v381
        %s384 = sld [smem:[#allocation2 + $0x7c]]
        %v385 = vstv %s384
        %v386 = vmul.f32 %v385, %v295
        %388 = vrot.lane.b32.xlu0 %v386, 127
        %v389 = vpop.permute.xlu0 %388
        %v391 = vadd.f32 %v327, %v389
        %s392 = sld [smem:[#allocation2 + $0x50]]
        %v393 = vstv %s392
        %v394 = vmul.f32 %v393, %v295
        %396 = vrot.lane.b32.xlu0 %v394, 126
        %v397 = vpop.permute.xlu0 %396
        %v399 = vadd.f32 %v335, %v397
        %s400 = sld [smem:[#allocation2 + $0x54]]
        %v401 = vstv %s400
        %v402 = vmul.f32 %v401, %v295
        %404 = vrot.lane.b32.xlu0 %v402, 126
        %v405 = vpop.permute.xlu0 %404
        %v407 = vadd.f32 %v343, %v405
        %s408 = sld [smem:[#allocation2 + $0x58]]
        %v409 = vstv %s408
        %v410 = vmul.f32 %v409, %v295
        %412 = vrot.lane.b32.xlu0 %v410, 126
        %v413 = vpop.permute.xlu0 %412
        %v415 = vadd.f32 %v351, %v413
        %s416 = sld [smem:[#allocation2 + $0x5c]]
        %v417 = vstv %s416
        %v418 = vmul.f32 %v417, %v295
        %420 = vrot.lane.b32.xlu0 %v418, 126
        %v421 = vpop.permute.xlu0 %420
        %v423 = vadd.f32 %v359, %v421
        %s424 = sld [smem:[#allocation2 + $0x80]]
        %v425 = vstv %s424
        %v426 = vmul.f32 %v425, %v295
        %428 = vrot.lane.b32.xlu0 %v426, 126
        %v429 = vpop.permute.xlu0 %428
        %v431 = vadd.f32 %v367, %v429
        %s432 = sld [smem:[#allocation2 + $0x84]]
        %v433 = vstv %s432
        %v434 = vmul.f32 %v433, %v295
        %436 = vrot.lane.b32.xlu0 %v434, 126
        %v437 = vpop.permute.xlu0 %436
        %v439 = vadd.f32 %v375, %v437
        %s440 = sld [smem:[#allocation2 + $0x88]]
        %v441 = vstv %s440
        %v442 = vmul.f32 %v441, %v295
        %444 = vrot.lane.b32.xlu0 %v442, 126
        %v445 = vpop.permute.xlu0 %444
        %v447 = vadd.f32 %v383, %v445
        %s448 = sld [smem:[#allocation2 + $0x8c]]
        %v449 = vstv %s448
        %v450 = vmul.f32 %v449, %v295
        %452 = vrot.lane.b32.xlu0 %v450, 126
        %v453 = vpop.permute.xlu0 %452
        %v455 = vadd.f32 %v391, %v453
        %s456 = sadd.s32 %s210, 2
        %s457 = scalar_lea.vmem %s209, %s456
        %v458 = vld [vmem:[%s457] sm:$0xff]
        %s459 = sld [smem:[#allocation2 + $0x90]]
        %v460 = vstv %s459
        %v461 = vmul.f32 %v460, %v458
        %v462 = vadd.f32 %v431, %v461
        %s463 = sld [smem:[#allocation2 + $0x94]]
        %v464 = vstv %s463
        %v465 = vmul.f32 %v464, %v458
        %v466 = vadd.f32 %v439, %v465
        %s467 = sld [smem:[#allocation2 + $0x98]]
        %v468 = vstv %s467
        %v469 = vmul.f32 %v468, %v458
        %v470 = vadd.f32 %v447, %v469
        %s471 = sld [smem:[#allocation2 + $0x9c]]
        %v472 = vstv %s471
        %v473 = vmul.f32 %v472, %v458
        %v474 = vadd.f32 %v455, %v473
        %s475 = sld [smem:[#allocation2 + $0xa0]]
        %v476 = vstv %s475
        %v477 = vmul.f32 %v476, %v458
        %479 = vrot.lane.b32.xlu0 %v477, 127
        %v480 = vpop.permute.xlu0 %479
        %v482 = vadd.f32 %v462, %v480
        %s483 = sld [smem:[#allocation2 + $0xa4]]
        %v484 = vstv %s483
        %v485 = vmul.f32 %v484, %v458
        %487 = vrot.lane.b32.xlu0 %v485, 127
        %v488 = vpop.permute.xlu0 %487
        %v490 = vadd.f32 %v466, %v488
        %s491 = sld [smem:[#allocation2 + $0xa8]]
        %v492 = vstv %s491
        %v493 = vmul.f32 %v492, %v458
        %495 = vrot.lane.b32.xlu0 %v493, 127
        %v496 = vpop.permute.xlu0 %495
        %v498 = vadd.f32 %v470, %v496
        %s499 = sld [smem:[#allocation2 + $0xac]]
        %v500 = vstv %s499
        %v501 = vmul.f32 %v500, %v458
        %503 = vrot.lane.b32.xlu0 %v501, 127
        %v504 = vpop.permute.xlu0 %503
        %v506 = vadd.f32 %v474, %v504
        %s507 = sld [smem:[#allocation2 + $0xb0]]
        %v508 = vstv %s507
        %v509 = vmul.f32 %v508, %v458
        %511 = vrot.lane.b32.xlu0 %v509, 126
        %v512 = vpop.permute.xlu0 %511
        %v514 = vadd.f32 %v482, %v512
        %s515 = sld [smem:[#allocation2 + $0xb4]]
        %v516 = vstv %s515
        %v517 = vmul.f32 %v516, %v458
        %519 = vrot.lane.b32.xlu0 %v517, 126
        %v520 = vpop.permute.xlu0 %519
        %v522 = vadd.f32 %v490, %v520
        %s523 = sld [smem:[#allocation2 + $0xb8]]
        %v524 = vstv %s523
        %v525 = vmul.f32 %v524, %v458
        %527 = vrot.lane.b32.xlu0 %v525, 126
        %v528 = vpop.permute.xlu0 %527
        %v530 = vadd.f32 %v498, %v528
        %s531 = sld [smem:[#allocation2 + $0xbc]]
        %v532 = vstv %s531
        %v533 = vmul.f32 %v532, %v458
        %535 = vrot.lane.b32.xlu0 %v533, 126
        %v536 = vpop.permute.xlu0 %535
        %v538 = vadd.f32 %v506, %v536
        %s539 = sadd.s32 %s210, 24
        %s540 = scalar_lea.vmem %s209, %s539
        %v541 = vld [vmem:[%s540] sm:$0xff]
        %s542 = sld [smem:[#allocation2 + $0x1]]
        %v543 = vstv %s542
        %v544 = vmul.f32 %v543, %v541
        %v545 = vadd.f32 %v399, %v544
        %s546 = sld [smem:[#allocation2 + $0x5]]
        %v547 = vstv %s546
        %v548 = vmul.f32 %v547, %v541
        %v549 = vadd.f32 %v407, %v548
        %s550 = sld [smem:[#allocation2 + $0x9]]
        %v551 = vstv %s550
        %v552 = vmul.f32 %v551, %v541
        %v553 = vadd.f32 %v415, %v552
        %s554 = sld [smem:[#allocation2 + $0xd]]
        %v555 = vstv %s554
        %v556 = vmul.f32 %v555, %v541
        %v557 = vadd.f32 %v423, %v556
        %s558 = sld [smem:[#allocation2 + $0x11]]
        %v559 = vstv %s558
        %v560 = vmul.f32 %v559, %v541
        %562 = vrot.lane.b32.xlu0 %v560, 127
        %v563 = vpop.permute.xlu0 %562
        %v565 = vadd.f32 %v545, %v563
        %s566 = sld [smem:[#allocation2 + $0x15]]
        %v567 = vstv %s566
        %v568 = vmul.f32 %v567, %v541
        %570 = vrot.lane.b32.xlu0 %v568, 127
        %v571 = vpop.permute.xlu0 %570
        %v573 = vadd.f32 %v549, %v571
        %s574 = sld [smem:[#allocation2 + $0x19]]
        %v575 = vstv %s574
        %v576 = vmul.f32 %v575, %v541
        %578 = vrot.lane.b32.xlu0 %v576, 127
        %v579 = vpop.permute.xlu0 %578
        %v581 = vadd.f32 %v553, %v579
        %s582 = sld [smem:[#allocation2 + $0x1d]]
        %v583 = vstv %s582
        %v584 = vmul.f32 %v583, %v541
        %586 = vrot.lane.b32.xlu0 %v584, 127
        %v587 = vpop.permute.xlu0 %586
        %v589 = vadd.f32 %v557, %v587
        %s590 = sld [smem:[#allocation2 + $0x21]]
        %v591 = vstv %s590
        %v592 = vmul.f32 %v591, %v541
        %594 = vrot.lane.b32.xlu0 %v592, 126
        %v595 = vpop.permute.xlu0 %594
        %v597 = vadd.f32 %v565, %v595
        %s598 = sld [smem:[#allocation2 + $0x25]]
        %v599 = vstv %s598
        %v600 = vmul.f32 %v599, %v541
        %602 = vrot.lane.b32.xlu0 %v600, 126
        %v603 = vpop.permute.xlu0 %602
        %v605 = vadd.f32 %v573, %v603
        %s606 = sld [smem:[#allocation2 + $0x29]]
        %v607 = vstv %s606
        %v608 = vmul.f32 %v607, %v541
        %610 = vrot.lane.b32.xlu0 %v608, 126
        %v611 = vpop.permute.xlu0 %610
        %v613 = vadd.f32 %v581, %v611
        %s614 = sld [smem:[#allocation2 + $0x2d]]
        %v615 = vstv %s614
        %v616 = vmul.f32 %v615, %v541
        %618 = vrot.lane.b32.xlu0 %v616, 126
        %v619 = vpop.permute.xlu0 %618
        %v621 = vadd.f32 %v589, %v619
        %s622 = sadd.s32 %s293, 24
        %s623 = scalar_lea.vmem %s209, %s622
        %v624 = vld [vmem:[%s623] sm:$0xff]
        %s625 = sld [smem:[#allocation2 + $0x31]]
        %v626 = vstv %s625
        %v627 = vmul.f32 %v626, %v624
        %v628 = vadd.f32 %v597, %v627
        %s629 = sld [smem:[#allocation2 + $0x35]]
        %v630 = vstv %s629
        %v631 = vmul.f32 %v630, %v624
        %v632 = vadd.f32 %v605, %v631
        %s633 = sld [smem:[#allocation2 + $0x39]]
        %v634 = vstv %s633
        %v635 = vmul.f32 %v634, %v624
        %v636 = vadd.f32 %v613, %v635
        %s637 = sld [smem:[#allocation2 + $0x3d]]
        %v638 = vstv %s637
        %v639 = vmul.f32 %v638, %v624
        %v640 = vadd.f32 %v621, %v639
        %s641 = sld [smem:[#allocation2 + $0x61]]
        %v642 = vstv %s641
        %v643 = vmul.f32 %v642, %v624
        %v644 = vadd.f32 %v514, %v643
        %s645 = sld [smem:[#allocation2 + $0x65]]
        %v646 = vstv %s645
        %v647 = vmul.f32 %v646, %v624
        %v648 = vadd.f32 %v522, %v647
        %s649 = sld [smem:[#allocation2 + $0x69]]
        %v650 = vstv %s649
        %v651 = vmul.f32 %v650, %v624
        %v652 = vadd.f32 %v530, %v651
        %s653 = sld [smem:[#allocation2 + $0x6d]]
        %v654 = vstv %s653
        %v655 = vmul.f32 %v654, %v624
        %v656 = vadd.f32 %v538, %v655
        %s657 = sld [smem:[#allocation2 + $0x41]]
        %v658 = vstv %s657
        %v659 = vmul.f32 %v658, %v624
        %661 = vrot.lane.b32.xlu0 %v659, 127
        %v662 = vpop.permute.xlu0 %661
        %v664 = vadd.f32 %v628, %v662
        %s665 = sld [smem:[#allocation2 + $0x45]]
        %v666 = vstv %s665
        %v667 = vmul.f32 %v666, %v624
        %669 = vrot.lane.b32.xlu0 %v667, 127
        %v670 = vpop.permute.xlu0 %669
        %v672 = vadd.f32 %v632, %v670
        %s673 = sld [smem:[#allocation2 + $0x49]]
        %v674 = vstv %s673
        %v675 = vmul.f32 %v674, %v624
        %677 = vrot.lane.b32.xlu0 %v675, 127
        %v678 = vpop.permute.xlu0 %677
        %v680 = vadd.f32 %v636, %v678
        %s681 = sld [smem:[#allocation2 + $0x4d]]
        %v682 = vstv %s681
        %v683 = vmul.f32 %v682, %v624
        %685 = vrot.lane.b32.xlu0 %v683, 127
        %v686 = vpop.permute.xlu0 %685
        %v688 = vadd.f32 %v640, %v686
        %s689 = sld [smem:[#allocation2 + $0x71]]
        %v690 = vstv %s689
        %v691 = vmul.f32 %v690, %v624
        %693 = vrot.lane.b32.xlu0 %v691, 127
        %v694 = vpop.permute.xlu0 %693
        %v696 = vadd.f32 %v644, %v694
        %s697 = sld [smem:[#allocation2 + $0x75]]
        %v698 = vstv %s697
        %v699 = vmul.f32 %v698, %v624
        %701 = vrot.lane.b32.xlu0 %v699, 127
        %v702 = vpop.permute.xlu0 %701
        %v704 = vadd.f32 %v648, %v702
        %s705 = sld [smem:[#allocation2 + $0x79]]
        %v706 = vstv %s705
        %v707 = vmul.f32 %v706, %v624
        %709 = vrot.lane.b32.xlu0 %v707, 127
        %v710 = vpop.permute.xlu0 %709
        %v712 = vadd.f32 %v652, %v710
        %s713 = sld [smem:[#allocation2 + $0x7d]]
        %v714 = vstv %s713
        %v715 = vmul.f32 %v714, %v624
        %717 = vrot.lane.b32.xlu0 %v715, 127
        %v718 = vpop.permute.xlu0 %717
        %v720 = vadd.f32 %v656, %v718
        %s721 = sld [smem:[#allocation2 + $0x51]]
        %v722 = vstv %s721
        %v723 = vmul.f32 %v722, %v624
        %725 = vrot.lane.b32.xlu0 %v723, 126
        %v726 = vpop.permute.xlu0 %725
        %v728 = vadd.f32 %v664, %v726
        %s729 = sld [smem:[#allocation2 + $0x55]]
        %v730 = vstv %s729
        %v731 = vmul.f32 %v730, %v624
        %733 = vrot.lane.b32.xlu0 %v731, 126
        %v734 = vpop.permute.xlu0 %733
        %v736 = vadd.f32 %v672, %v734
        %s737 = sld [smem:[#allocation2 + $0x59]]
        %v738 = vstv %s737
        %v739 = vmul.f32 %v738, %v624
        %741 = vrot.lane.b32.xlu0 %v739, 126
        %v742 = vpop.permute.xlu0 %741
        %v744 = vadd.f32 %v680, %v742
        %s745 = sld [smem:[#allocation2 + $0x5d]]
        %v746 = vstv %s745
        %v747 = vmul.f32 %v746, %v624
        %749 = vrot.lane.b32.xlu0 %v747, 126
        %v750 = vpop.permute.xlu0 %749
        %v752 = vadd.f32 %v688, %v750
        %s753 = sld [smem:[#allocation2 + $0x81]]
        %v754 = vstv %s753
        %v755 = vmul.f32 %v754, %v624
        %757 = vrot.lane.b32.xlu0 %v755, 126
        %v758 = vpop.permute.xlu0 %757
        %v760 = vadd.f32 %v696, %v758
        %s761 = sld [smem:[#allocation2 + $0x85]]
        %v762 = vstv %s761
        %v763 = vmul.f32 %v762, %v624
        %765 = vrot.lane.b32.xlu0 %v763, 126
        %v766 = vpop.permute.xlu0 %765
        %v768 = vadd.f32 %v704, %v766
        %s769 = sld [smem:[#allocation2 + $0x89]]
        %v770 = vstv %s769
        %v771 = vmul.f32 %v770, %v624
        %773 = vrot.lane.b32.xlu0 %v771, 126
        %v774 = vpop.permute.xlu0 %773
        %v776 = vadd.f32 %v712, %v774
        %s777 = sld [smem:[#allocation2 + $0x8d]]
        %v778 = vstv %s777
        %v779 = vmul.f32 %v778, %v624
        %781 = vrot.lane.b32.xlu0 %v779, 126
        %v782 = vpop.permute.xlu0 %781
        %v784 = vadd.f32 %v720, %v782
        %s785 = sadd.s32 %s456, 24
        %s786 = scalar_lea.vmem %s209, %s785
        %v787 = vld [vmem:[%s786] sm:$0xff]
        %s788 = sld [smem:[#allocation2 + $0x91]]
        %v789 = vstv %s788
        %v790 = vmul.f32 %v789, %v787
        %v791 = vadd.f32 %v760, %v790
        %s792 = sld [smem:[#allocation2 + $0x95]]
        %v793 = vstv %s792
        %v794 = vmul.f32 %v793, %v787
        %v795 = vadd.f32 %v768, %v794
        %s796 = sld [smem:[#allocation2 + $0x99]]
        %v797 = vstv %s796
        %v798 = vmul.f32 %v797, %v787
        %v799 = vadd.f32 %v776, %v798
        %s800 = sld [smem:[#allocation2 + $0x9d]]
        %v801 = vstv %s800
        %v802 = vmul.f32 %v801, %v787
        %v803 = vadd.f32 %v784, %v802
        %s804 = sld [smem:[#allocation2 + $0xa1]]
        %v805 = vstv %s804
        %v806 = vmul.f32 %v805, %v787
        %808 = vrot.lane.b32.xlu0 %v806, 127
        %v809 = vpop.permute.xlu0 %808
        %v811 = vadd.f32 %v791, %v809
        %s812 = sld [smem:[#allocation2 + $0xa5]]
        %v813 = vstv %s812
        %v814 = vmul.f32 %v813, %v787
        %816 = vrot.lane.b32.xlu0 %v814, 127
        %v817 = vpop.permute.xlu0 %816
        %v819 = vadd.f32 %v795, %v817
        %s820 = sld [smem:[#allocation2 + $0xa9]]
        %v821 = vstv %s820
        %v822 = vmul.f32 %v821, %v787
        %824 = vrot.lane.b32.xlu0 %v822, 127
        %v825 = vpop.permute.xlu0 %824
        %v827 = vadd.f32 %v799, %v825
        %s828 = sld [smem:[#allocation2 + $0xad]]
        %v829 = vstv %s828
        %v830 = vmul.f32 %v829, %v787
        %832 = vrot.lane.b32.xlu0 %v830, 127
        %v833 = vpop.permute.xlu0 %832
        %v835 = vadd.f32 %v803, %v833
        %s836 = sld [smem:[#allocation2 + $0xb1]]
        %v837 = vstv %s836
        %v838 = vmul.f32 %v837, %v787
        %840 = vrot.lane.b32.xlu0 %v838, 126
        %v841 = vpop.permute.xlu0 %840
        %v843 = vadd.f32 %v811, %v841
        %s844 = sld [smem:[#allocation2 + $0xb5]]
        %v845 = vstv %s844
        %v846 = vmul.f32 %v845, %v787
        %848 = vrot.lane.b32.xlu0 %v846, 126
        %v849 = vpop.permute.xlu0 %848
        %v851 = vadd.f32 %v819, %v849
        %s852 = sld [smem:[#allocation2 + $0xb9]]
        %v853 = vstv %s852
        %v854 = vmul.f32 %v853, %v787
        %856 = vrot.lane.b32.xlu0 %v854, 126
        %v857 = vpop.permute.xlu0 %856
        %v859 = vadd.f32 %v827, %v857
        %s860 = sld [smem:[#allocation2 + $0xbd]]
        %v861 = vstv %s860
        %v862 = vmul.f32 %v861, %v787
        %864 = vrot.lane.b32.xlu0 %v862, 126
        %v865 = vpop.permute.xlu0 %864
        %v867 = vadd.f32 %v835, %v865
        %s868 = sadd.s32 %s210, 48
        %s869 = scalar_lea.vmem %s209, %s868
        %v870 = vld [vmem:[%s869] sm:$0xff]
        %s871 = sld [smem:[#allocation2 + $0x2]]
        %v872 = vstv %s871
        %v873 = vmul.f32 %v872, %v870
        %v874 = vadd.f32 %v728, %v873
        %s875 = sld [smem:[#allocation2 + $0x6]]
        %v876 = vstv %s875
        %v877 = vmul.f32 %v876, %v870
        %v878 = vadd.f32 %v736, %v877
        %s879 = sld [smem:[#allocation2 + $0xa]]
        %v880 = vstv %s879
        %v881 = vmul.f32 %v880, %v870
        %v882 = vadd.f32 %v744, %v881
        %s883 = sld [smem:[#allocation2 + $0xe]]
        %v884 = vstv %s883
        %v885 = vmul.f32 %v884, %v870
        %v886 = vadd.f32 %v752, %v885
        %s887 = sld [smem:[#allocation2 + $0x12]]
        %v888 = vstv %s887
        %v889 = vmul.f32 %v888, %v870
        %891 = vrot.lane.b32.xlu0 %v889, 127
        %v892 = vpop.permute.xlu0 %891
        %v894 = vadd.f32 %v874, %v892
        %s895 = sld [smem:[#allocation2 + $0x16]]
        %v896 = vstv %s895
        %v897 = vmul.f32 %v896, %v870
        %899 = vrot.lane.b32.xlu0 %v897, 127
        %v900 = vpop.permute.xlu0 %899
        %v902 = vadd.f32 %v878, %v900
        %s903 = sld [smem:[#allocation2 + $0x1a]]
        %v904 = vstv %s903
        %v905 = vmul.f32 %v904, %v870
        %907 = vrot.lane.b32.xlu0 %v905, 127
        %v908 = vpop.permute.xlu0 %907
        %v910 = vadd.f32 %v882, %v908
        %s911 = sld [smem:[#allocation2 + $0x1e]]
        %v912 = vstv %s911
        %v913 = vmul.f32 %v912, %v870
        %915 = vrot.lane.b32.xlu0 %v913, 127
        %v916 = vpop.permute.xlu0 %915
        %v918 = vadd.f32 %v886, %v916
        %s919 = sld [smem:[#allocation2 + $0x22]]
        %v920 = vstv %s919
        %v921 = vmul.f32 %v920, %v870
        %923 = vrot.lane.b32.xlu0 %v921, 126
        %v924 = vpop.permute.xlu0 %923
        %v926 = vadd.f32 %v894, %v924
        %s927 = sld [smem:[#allocation2 + $0x26]]
        %v928 = vstv %s927
        %v929 = vmul.f32 %v928, %v870
        %931 = vrot.lane.b32.xlu0 %v929, 126
        %v932 = vpop.permute.xlu0 %931
        %v934 = vadd.f32 %v902, %v932
        %s935 = sld [smem:[#allocation2 + $0x2a]]
        %v936 = vstv %s935
        %v937 = vmul.f32 %v936, %v870
        %939 = vrot.lane.b32.xlu0 %v937, 126
        %v940 = vpop.permute.xlu0 %939
        %v942 = vadd.f32 %v910, %v940
        %s943 = sld [smem:[#allocation2 + $0x2e]]
        %v944 = vstv %s943
        %v945 = vmul.f32 %v944, %v870
        %947 = vrot.lane.b32.xlu0 %v945, 126
        %v948 = vpop.permute.xlu0 %947
        %v950 = vadd.f32 %v918, %v948
        %s951 = sadd.s32 %s293, 48
        %s952 = scalar_lea.vmem %s209, %s951
        %v953 = vld [vmem:[%s952] sm:$0xff]
        %s954 = sld [smem:[#allocation2 + $0x32]]
        %v955 = vstv %s954
        %v956 = vmul.f32 %v955, %v953
        %v957 = vadd.f32 %v926, %v956
        %s958 = sld [smem:[#allocation2 + $0x36]]
        %v959 = vstv %s958
        %v960 = vmul.f32 %v959, %v953
        %v961 = vadd.f32 %v934, %v960
        %s962 = sld [smem:[#allocation2 + $0x3a]]
        %v963 = vstv %s962
        %v964 = vmul.f32 %v963, %v953
        %v965 = vadd.f32 %v942, %v964
        %s966 = sld [smem:[#allocation2 + $0x3e]]
        %v967 = vstv %s966
        %v968 = vmul.f32 %v967, %v953
        %v969 = vadd.f32 %v950, %v968
        %s970 = sld [smem:[#allocation2 + $0x62]]
        %v971 = vstv %s970
        %v972 = vmul.f32 %v971, %v953
        %v973 = vadd.f32 %v843, %v972
        %s974 = sld [smem:[#allocation2 + $0x66]]
        %v975 = vstv %s974
        %v976 = vmul.f32 %v975, %v953
        %v977 = vadd.f32 %v851, %v976
        %s978 = sld [smem:[#allocation2 + $0x6a]]
        %v979 = vstv %s978
        %v980 = vmul.f32 %v979, %v953
        %v981 = vadd.f32 %v859, %v980
        %s982 = sld [smem:[#allocation2 + $0x6e]]
        %v983 = vstv %s982
        %v984 = vmul.f32 %v983, %v953
        %v985 = vadd.f32 %v867, %v984
        %s986 = sld [smem:[#allocation2 + $0x42]]
        %v987 = vstv %s986
        %v988 = vmul.f32 %v987, %v953
        %990 = vrot.lane.b32.xlu0 %v988, 127
        %v991 = vpop.permute.xlu0 %990
        %v993 = vadd.f32 %v957, %v991
        %s994 = sld [smem:[#allocation2 + $0x46]]
        %v995 = vstv %s994
        %v996 = vmul.f32 %v995, %v953
        %998 = vrot.lane.b32.xlu0 %v996, 127
        %v999 = vpop.permute.xlu0 %998
        %v1001 = vadd.f32 %v961, %v999
        %s1002 = sld [smem:[#allocation2 + $0x4a]]
        %v1003 = vstv %s1002
        %v1004 = vmul.f32 %v1003, %v953
        %1006 = vrot.lane.b32.xlu0 %v1004, 127
        %v1007 = vpop.permute.xlu0 %1006
        %v1009 = vadd.f32 %v965, %v1007
        %s1010 = sld [smem:[#allocation2 + $0x4e]]
        %v1011 = vstv %s1010
        %v1012 = vmul.f32 %v1011, %v953
        %1014 = vrot.lane.b32.xlu0 %v1012, 127
        %v1015 = vpop.permute.xlu0 %1014
        %v1017 = vadd.f32 %v969, %v1015
        %s1018 = sld [smem:[#allocation2 + $0x72]]
        %v1019 = vstv %s1018
        %v1020 = vmul.f32 %v1019, %v953
        %1022 = vrot.lane.b32.xlu0 %v1020, 127
        %v1023 = vpop.permute.xlu0 %1022
        %v1025 = vadd.f32 %v973, %v1023
        %s1026 = sld [smem:[#allocation2 + $0x76]]
        %v1027 = vstv %s1026
        %v1028 = vmul.f32 %v1027, %v953
        %1030 = vrot.lane.b32.xlu0 %v1028, 127
        %v1031 = vpop.permute.xlu0 %1030
        %v1033 = vadd.f32 %v977, %v1031
        %s1034 = sld [smem:[#allocation2 + $0x7a]]
        %v1035 = vstv %s1034
        %v1036 = vmul.f32 %v1035, %v953
        %1038 = vrot.lane.b32.xlu0 %v1036, 127
        %v1039 = vpop.permute.xlu0 %1038
        %v1041 = vadd.f32 %v981, %v1039
        %s1042 = sld [smem:[#allocation2 + $0x7e]]
        %v1043 = vstv %s1042
        %v1044 = vmul.f32 %v1043, %v953
        %1046 = vrot.lane.b32.xlu0 %v1044, 127
        %v1047 = vpop.permute.xlu0 %1046
        %v1049 = vadd.f32 %v985, %v1047
        %s1050 = sld [smem:[#allocation2 + $0x52]]
        %v1051 = vstv %s1050
        %v1052 = vmul.f32 %v1051, %v953
        %1054 = vrot.lane.b32.xlu0 %v1052, 126
        %v1055 = vpop.permute.xlu0 %1054
        %v1057 = vadd.f32 %v993, %v1055
        %s1058 = sld [smem:[#allocation2 + $0x56]]
        %v1059 = vstv %s1058
        %v1060 = vmul.f32 %v1059, %v953
        %1062 = vrot.lane.b32.xlu0 %v1060, 126
        %v1063 = vpop.permute.xlu0 %1062
        %v1065 = vadd.f32 %v1001, %v1063
        %s1066 = sld [smem:[#allocation2 + $0x5a]]
        %v1067 = vstv %s1066
        %v1068 = vmul.f32 %v1067, %v953
        %1070 = vrot.lane.b32.xlu0 %v1068, 126
        %v1071 = vpop.permute.xlu0 %1070
        %v1073 = vadd.f32 %v1009, %v1071
        %s1074 = sld [smem:[#allocation2 + $0x5e]]
        %v1075 = vstv %s1074
        %v1076 = vmul.f32 %v1075, %v953
        %1078 = vrot.lane.b32.xlu0 %v1076, 126
        %v1079 = vpop.permute.xlu0 %1078
        %v1081 = vadd.f32 %v1017, %v1079
        %s1082 = sld [smem:[#allocation2 + $0x82]]
        %v1083 = vstv %s1082
        %v1084 = vmul.f32 %v1083, %v953
        %1086 = vrot.lane.b32.xlu0 %v1084, 126
        %v1087 = vpop.permute.xlu0 %1086
        %v1089 = vadd.f32 %v1025, %v1087
        %s1090 = sld [smem:[#allocation2 + $0x86]]
        %v1091 = vstv %s1090
        %v1092 = vmul.f32 %v1091, %v953
        %1094 = vrot.lane.b32.xlu0 %v1092, 126
        %v1095 = vpop.permute.xlu0 %1094
        %v1097 = vadd.f32 %v1033, %v1095
        %s1098 = sld [smem:[#allocation2 + $0x8a]]
        %v1099 = vstv %s1098
        %v1100 = vmul.f32 %v1099, %v953
        %1102 = vrot.lane.b32.xlu0 %v1100, 126
        %v1103 = vpop.permute.xlu0 %1102
        %v1105 = vadd.f32 %v1041, %v1103
        %s1106 = sld [smem:[#allocation2 + $0x8e]]
        %v1107 = vstv %s1106
        %v1108 = vmul.f32 %v1107, %v953
        %1110 = vrot.lane.b32.xlu0 %v1108, 126
        %v1111 = vpop.permute.xlu0 %1110
        %v1113 = vadd.f32 %v1049, %v1111
        %s1114 = sadd.s32 %s456, 48
        %s1115 = scalar_lea.vmem %s209, %s1114
        %v1116 = vld [vmem:[%s1115] sm:$0xff]
        %s1117 = sld [smem:[#allocation2 + $0x92]]
        %v1118 = vstv %s1117
        %v1119 = vmul.f32 %v1118, %v1116
        %v1120 = vadd.f32 %v1089, %v1119
        %s1121 = sld [smem:[#allocation2 + $0x96]]
        %v1122 = vstv %s1121
        %v1123 = vmul.f32 %v1122, %v1116
        %v1124 = vadd.f32 %v1097, %v1123
        %s1125 = sld [smem:[#allocation2 + $0x9a]]
        %v1126 = vstv %s1125
        %v1127 = vmul.f32 %v1126, %v1116
        %v1128 = vadd.f32 %v1105, %v1127
        %s1129 = sld [smem:[#allocation2 + $0x9e]]
        %v1130 = vstv %s1129
        %v1131 = vmul.f32 %v1130, %v1116
        %v1132 = vadd.f32 %v1113, %v1131
        %s1133 = sld [smem:[#allocation2 + $0xa2]]
        %v1134 = vstv %s1133
        %v1135 = vmul.f32 %v1134, %v1116
        %1137 = vrot.lane.b32.xlu0 %v1135, 127
        %v1138 = vpop.permute.xlu0 %1137
        %v1140 = vadd.f32 %v1120, %v1138
        %s1141 = sld [smem:[#allocation2 + $0xa6]]
        %v1142 = vstv %s1141
        %v1143 = vmul.f32 %v1142, %v1116
        %1145 = vrot.lane.b32.xlu0 %v1143, 127
        %v1146 = vpop.permute.xlu0 %1145
        %v1148 = vadd.f32 %v1124, %v1146
        %s1149 = sld [smem:[#allocation2 + $0xaa]]
        %v1150 = vstv %s1149
        %v1151 = vmul.f32 %v1150, %v1116
        %1153 = vrot.lane.b32.xlu0 %v1151, 127
        %v1154 = vpop.permute.xlu0 %1153
        %v1156 = vadd.f32 %v1128, %v1154
        %s1157 = sld [smem:[#allocation2 + $0xae]]
        %v1158 = vstv %s1157
        %v1159 = vmul.f32 %v1158, %v1116
        %1161 = vrot.lane.b32.xlu0 %v1159, 127
        %v1162 = vpop.permute.xlu0 %1161
        %v1164 = vadd.f32 %v1132, %v1162
        %s1165 = sld [smem:[#allocation2 + $0xb2]]
        %v1166 = vstv %s1165
        %v1167 = vmul.f32 %v1166, %v1116
        %1169 = vrot.lane.b32.xlu0 %v1167, 126
        %v1170 = vpop.permute.xlu0 %1169
        %v1172 = vadd.f32 %v1140, %v1170
        %s1173 = sld [smem:[#allocation2 + $0xb6]]
        %v1174 = vstv %s1173
        %v1175 = vmul.f32 %v1174, %v1116
        %1177 = vrot.lane.b32.xlu0 %v1175, 126
        %v1178 = vpop.permute.xlu0 %1177
        %v1180 = vadd.f32 %v1148, %v1178
        %s1181 = sld [smem:[#allocation2 + $0xba]]
        %v1182 = vstv %s1181
        %v1183 = vmul.f32 %v1182, %v1116
        %1185 = vrot.lane.b32.xlu0 %v1183, 126
        %v1186 = vpop.permute.xlu0 %1185
        %v1188 = vadd.f32 %v1156, %v1186
        %s1189 = sld [smem:[#allocation2 + $0xbe]]
        %v1190 = vstv %s1189
        %v1191 = vmul.f32 %v1190, %v1116
        %1193 = vrot.lane.b32.xlu0 %v1191, 126
        %v1194 = vpop.permute.xlu0 %1193
        %v1196 = vadd.f32 %v1164, %v1194
        %s1197 = sadd.s32 %s210, 72
        %s1198 = scalar_lea.vmem %s209, %s1197
        %v1199 = vld [vmem:[%s1198] sm:$0xff]
        %s1200 = sld [smem:[#allocation2 + $0x3]]
        %v1201 = vstv %s1200
        %v1202 = vmul.f32 %v1201, %v1199
        %v1203 = vadd.f32 %v1057, %v1202
        %s1204 = sld [smem:[#allocation2 + $0x7]]
        %v1205 = vstv %s1204
        %v1206 = vmul.f32 %v1205, %v1199
        %v1207 = vadd.f32 %v1065, %v1206
        %s1208 = sld [smem:[#allocation2 + $0xb]]
        %v1209 = vstv %s1208
        %v1210 = vmul.f32 %v1209, %v1199
        %v1211 = vadd.f32 %v1073, %v1210
        %s1212 = sld [smem:[#allocation2 + $0xf]]
        %v1213 = vstv %s1212
        %v1214 = vmul.f32 %v1213, %v1199
        %v1215 = vadd.f32 %v1081, %v1214
        %s1216 = sld [smem:[#allocation2 + $0x13]]
        %v1217 = vstv %s1216
        %v1218 = vmul.f32 %v1217, %v1199
        %1220 = vrot.lane.b32.xlu0 %v1218, 127
        %v1221 = vpop.permute.xlu0 %1220
        %v1223 = vadd.f32 %v1203, %v1221
        %s1224 = sld [smem:[#allocation2 + $0x17]]
        %v1225 = vstv %s1224
        %v1226 = vmul.f32 %v1225, %v1199
        %1228 = vrot.lane.b32.xlu0 %v1226, 127
        %v1229 = vpop.permute.xlu0 %1228
        %v1231 = vadd.f32 %v1207, %v1229
        %s1232 = sld [smem:[#allocation2 + $0x1b]]
        %v1233 = vstv %s1232
        %v1234 = vmul.f32 %v1233, %v1199
        %1236 = vrot.lane.b32.xlu0 %v1234, 127
        %v1237 = vpop.permute.xlu0 %1236
        %v1239 = vadd.f32 %v1211, %v1237
        %s1240 = sld [smem:[#allocation2 + $0x1f]]
        %v1241 = vstv %s1240
        %v1242 = vmul.f32 %v1241, %v1199
        %1244 = vrot.lane.b32.xlu0 %v1242, 127
        %v1245 = vpop.permute.xlu0 %1244
        %v1247 = vadd.f32 %v1215, %v1245
        %s1248 = sld [smem:[#allocation2 + $0x23]]
        %v1249 = vstv %s1248
        %v1250 = vmul.f32 %v1249, %v1199
        %1252 = vrot.lane.b32.xlu0 %v1250, 126
        %v1253 = vpop.permute.xlu0 %1252
        %v1255 = vadd.f32 %v1223, %v1253
        %s1256 = sld [smem:[#allocation2 + $0x27]]
        %v1257 = vstv %s1256
        %v1258 = vmul.f32 %v1257, %v1199
        %1260 = vrot.lane.b32.xlu0 %v1258, 126
        %v1261 = vpop.permute.xlu0 %1260
        %v1263 = vadd.f32 %v1231, %v1261
        %s1264 = sld [smem:[#allocation2 + $0x2b]]
        %v1265 = vstv %s1264
        %v1266 = vmul.f32 %v1265, %v1199
        %1268 = vrot.lane.b32.xlu0 %v1266, 126
        %v1269 = vpop.permute.xlu0 %1268
        %v1271 = vadd.f32 %v1239, %v1269
        %s1272 = sld [smem:[#allocation2 + $0x2f]]
        %v1273 = vstv %s1272
        %v1274 = vmul.f32 %v1273, %v1199
        %1276 = vrot.lane.b32.xlu0 %v1274, 126
        %v1277 = vpop.permute.xlu0 %1276
        %v1279 = vadd.f32 %v1247, %v1277
        %s1280 = sadd.s32 %s293, 72
        %s1281 = scalar_lea.vmem %s209, %s1280
        %v1282 = vld [vmem:[%s1281] sm:$0xff]
        %s1283 = sld [smem:[#allocation2 + $0x33]]
        %v1284 = vstv %s1283
        %v1285 = vmul.f32 %v1284, %v1282
        %v1286 = vadd.f32 %v1255, %v1285
        %s1287 = sld [smem:[#allocation2 + $0x37]]
        %v1288 = vstv %s1287
        %v1289 = vmul.f32 %v1288, %v1282
        %v1290 = vadd.f32 %v1263, %v1289
        %s1291 = sld [smem:[#allocation2 + $0x3b]]
        %v1292 = vstv %s1291
        %v1293 = vmul.f32 %v1292, %v1282
        %v1294 = vadd.f32 %v1271, %v1293
        %s1295 = sld [smem:[#allocation2 + $0x3f]]
        %v1296 = vstv %s1295
        %v1297 = vmul.f32 %v1296, %v1282
        %v1298 = vadd.f32 %v1279, %v1297
        %s1299 = sld [smem:[#allocation2 + $0x63]]
        %v1300 = vstv %s1299
        %v1301 = vmul.f32 %v1300, %v1282
        %v1302 = vadd.f32 %v1172, %v1301
        %s1303 = sld [smem:[#allocation2 + $0x67]]
        %v1304 = vstv %s1303
        %v1305 = vmul.f32 %v1304, %v1282
        %v1306 = vadd.f32 %v1180, %v1305
        %s1307 = sld [smem:[#allocation2 + $0x6b]]
        %v1308 = vstv %s1307
        %v1309 = vmul.f32 %v1308, %v1282
        %v1310 = vadd.f32 %v1188, %v1309
        %s1311 = sld [smem:[#allocation2 + $0x6f]]
        %v1312 = vstv %s1311
        %v1313 = vmul.f32 %v1312, %v1282
        %v1314 = vadd.f32 %v1196, %v1313
        %s1315 = sld [smem:[#allocation2 + $0x43]]
        %v1316 = vstv %s1315
        %v1317 = vmul.f32 %v1316, %v1282
        %1319 = vrot.lane.b32.xlu0 %v1317, 127
        %v1320 = vpop.permute.xlu0 %1319
        %v1322 = vadd.f32 %v1286, %v1320
        %s1323 = sld [smem:[#allocation2 + $0x47]]
        %v1324 = vstv %s1323
        %v1325 = vmul.f32 %v1324, %v1282
        %1327 = vrot.lane.b32.xlu0 %v1325, 127
        %v1328 = vpop.permute.xlu0 %1327
        %v1330 = vadd.f32 %v1290, %v1328
        %s1331 = sld [smem:[#allocation2 + $0x4b]]
        %v1332 = vstv %s1331
        %v1333 = vmul.f32 %v1332, %v1282
        %1335 = vrot.lane.b32.xlu0 %v1333, 127
        %v1336 = vpop.permute.xlu0 %1335
        %v1338 = vadd.f32 %v1294, %v1336
        %s1339 = sld [smem:[#allocation2 + $0x4f]]
        %v1340 = vstv %s1339
        %v1341 = vmul.f32 %v1340, %v1282
        %1343 = vrot.lane.b32.xlu0 %v1341, 127
        %v1344 = vpop.permute.xlu0 %1343
        %v1346 = vadd.f32 %v1298, %v1344
        %s1347 = sld [smem:[#allocation2 + $0x73]]
        %v1348 = vstv %s1347
        %v1349 = vmul.f32 %v1348, %v1282
        %1351 = vrot.lane.b32.xlu0 %v1349, 127
        %v1352 = vpop.permute.xlu0 %1351
        %v1354 = vadd.f32 %v1302, %v1352
        %s1355 = sld [smem:[#allocation2 + $0x77]]
        %v1356 = vstv %s1355
        %v1357 = vmul.f32 %v1356, %v1282
        %1359 = vrot.lane.b32.xlu0 %v1357, 127
        %v1360 = vpop.permute.xlu0 %1359
        %v1362 = vadd.f32 %v1306, %v1360
        %s1363 = sld [smem:[#allocation2 + $0x7b]]
        %v1364 = vstv %s1363
        %v1365 = vmul.f32 %v1364, %v1282
        %1367 = vrot.lane.b32.xlu0 %v1365, 127
        %v1368 = vpop.permute.xlu0 %1367
        %v1370 = vadd.f32 %v1310, %v1368
        %s1371 = sld [smem:[#allocation2 + $0x7f]]
        %v1372 = vstv %s1371
        %v1373 = vmul.f32 %v1372, %v1282
        %1375 = vrot.lane.b32.xlu0 %v1373, 127
        %v1376 = vpop.permute.xlu0 %1375
        %v1378 = vadd.f32 %v1314, %v1376
        %s1379 = sld [smem:[#allocation2 + $0x53]]
        %v1380 = vstv %s1379
        %v1381 = vmul.f32 %v1380, %v1282
        %1383 = vrot.lane.b32.xlu0 %v1381, 126
        %v1384 = vpop.permute.xlu0 %1383
        %v1386 = vadd.f32 %v1322, %v1384
        %s1387 = sld [smem:[#allocation2 + $0x57]]
        %v1388 = vstv %s1387
        %v1389 = vmul.f32 %v1388, %v1282
        %1391 = vrot.lane.b32.xlu0 %v1389, 126
        %v1392 = vpop.permute.xlu0 %1391
        %v1394 = vadd.f32 %v1330, %v1392
        %s1395 = sld [smem:[#allocation2 + $0x5b]]
        %v1396 = vstv %s1395
        %v1397 = vmul.f32 %v1396, %v1282
        %1399 = vrot.lane.b32.xlu0 %v1397, 126
        %v1400 = vpop.permute.xlu0 %1399
        %v1402 = vadd.f32 %v1338, %v1400
        %s1403 = sld [smem:[#allocation2 + $0x5f]]
        %v1404 = vstv %s1403
        %v1405 = vmul.f32 %v1404, %v1282
        %1407 = vrot.lane.b32.xlu0 %v1405, 126
        %v1408 = vpop.permute.xlu0 %1407
        %v1410 = vadd.f32 %v1346, %v1408
        %s1411 = sld [smem:[#allocation2 + $0x83]]
        %v1412 = vstv %s1411
        %v1413 = vmul.f32 %v1412, %v1282
        %1415 = vrot.lane.b32.xlu0 %v1413, 126
        %v1416 = vpop.permute.xlu0 %1415
        %v1418 = vadd.f32 %v1354, %v1416
        %s1419 = sld [smem:[#allocation2 + $0x87]]
        %v1420 = vstv %s1419
        %v1421 = vmul.f32 %v1420, %v1282
        %1423 = vrot.lane.b32.xlu0 %v1421, 126
        %v1424 = vpop.permute.xlu0 %1423
        %v1426 = vadd.f32 %v1362, %v1424
        %s1427 = sld [smem:[#allocation2 + $0x8b]]
        %v1428 = vstv %s1427
        %v1429 = vmul.f32 %v1428, %v1282
        %1431 = vrot.lane.b32.xlu0 %v1429, 126
        %v1432 = vpop.permute.xlu0 %1431
        %v1434 = vadd.f32 %v1370, %v1432
        %s1435 = sld [smem:[#allocation2 + $0x8f]]
        %v1436 = vstv %s1435
        %v1437 = vmul.f32 %v1436, %v1282
        %1439 = vrot.lane.b32.xlu0 %v1437, 126
        %v1440 = vpop.permute.xlu0 %1439
        %v1442 = vadd.f32 %v1378, %v1440
        %s1443 = sadd.s32 %s456, 72
        %s1444 = scalar_lea.vmem %s209, %s1443
        %v1445 = vld [vmem:[%s1444] sm:$0xff]
        %s1446 = sld [smem:[#allocation2 + $0x93]]
        %v1447 = vstv %s1446
        %v1448 = vmul.f32 %v1447, %v1445
        %v1449 = vadd.f32 %v1418, %v1448
        %s1450 = sld [smem:[#allocation2 + $0x97]]
        %v1451 = vstv %s1450
        %v1452 = vmul.f32 %v1451, %v1445
        %v1453 = vadd.f32 %v1426, %v1452
        %s1454 = sld [smem:[#allocation2 + $0x9b]]
        %v1455 = vstv %s1454
        %v1456 = vmul.f32 %v1455, %v1445
        %v1457 = vadd.f32 %v1434, %v1456
        %s1458 = sld [smem:[#allocation2 + $0x9f]]
        %v1459 = vstv %s1458
        %v1460 = vmul.f32 %v1459, %v1445
        %v1461 = vadd.f32 %v1442, %v1460
        %s1462 = sld [smem:[#allocation2 + $0xa3]]
        %v1463 = vstv %s1462
        %v1464 = vmul.f32 %v1463, %v1445
        %1466 = vrot.lane.b32.xlu0 %v1464, 127
        %v1467 = vpop.permute.xlu0 %1466
        %v1469 = vadd.f32 %v1449, %v1467
        %s1470 = sld [smem:[#allocation2 + $0xa7]]
        %v1471 = vstv %s1470
        %v1472 = vmul.f32 %v1471, %v1445
        %1474 = vrot.lane.b32.xlu0 %v1472, 127
        %v1475 = vpop.permute.xlu0 %1474
        %v1477 = vadd.f32 %v1453, %v1475
        %s1478 = sld [smem:[#allocation2 + $0xab]]
        %v1479 = vstv %s1478
        %v1480 = vmul.f32 %v1479, %v1445
        %1482 = vrot.lane.b32.xlu0 %v1480, 127
        %v1483 = vpop.permute.xlu0 %1482
        %v1485 = vadd.f32 %v1457, %v1483
        %s1486 = sld [smem:[#allocation2 + $0xaf]]
        %v1487 = vstv %s1486
        %v1488 = vmul.f32 %v1487, %v1445
        %1490 = vrot.lane.b32.xlu0 %v1488, 127
        %v1491 = vpop.permute.xlu0 %1490
        %v1493 = vadd.f32 %v1461, %v1491
        %s1494 = sld [smem:[#allocation2 + $0xb3]]
        %v1495 = vstv %s1494
        %v1496 = vmul.f32 %v1495, %v1445
        %1498 = vrot.lane.b32.xlu0 %v1496, 126
        %v1499 = vpop.permute.xlu0 %1498
        %v1501 = vadd.f32 %v1469, %v1499
        %s1502 = sld [smem:[#allocation2 + $0xb7]]
        %v1503 = vstv %s1502
        %v1504 = vmul.f32 %v1503, %v1445
        %1506 = vrot.lane.b32.xlu0 %v1504, 126
        %v1507 = vpop.permute.xlu0 %1506
        %v1509 = vadd.f32 %v1477, %v1507
        %s1510 = sld [smem:[#allocation2 + $0xbb]]
        %v1511 = vstv %s1510
        %v1512 = vmul.f32 %v1511, %v1445
        %1514 = vrot.lane.b32.xlu0 %v1512, 126
        %v1515 = vpop.permute.xlu0 %1514
        %v1517 = vadd.f32 %v1485, %v1515
        %s1518 = sld [smem:[#allocation2 + $0xbf]]
        %v1519 = vstv %s1518
        %v1520 = vmul.f32 %v1519, %v1445
        %1522 = vrot.lane.b32.xlu0 %v1520, 126
        %v1523 = vpop.permute.xlu0 %1522
        %v1525 = vadd.f32 %v1493, %v1523
        %s1526 = sld [smem:[#allocation5]]
        %v1527 = vstv %s1526
        %v1528 = vadd.f32 %v1386, %v1527
        %vm1529 = vcmask 261120
        %1530 = vst.msk [vmem:[%s204] sm:$0xff] %vm1529, %v1528
        %v1531 = vadd.f32 %v1501, %v1527
        %1533 = vrot.lane.b32.xlu0 %v1531, 32
        %v1534 = vpop.permute.xlu0 %1533
        %vm1536 = vcmask 523520
        %1537 = vst.msk [vmem:[%s204] sm:$0xff] %vm1536, %v1534
        %s1538 = sld [smem:[#allocation5 + $0x1]]
        %v1539 = vstv %s1538
        %v1540 = vadd.f32 %v1394, %v1539
        %s1541 = scalar_lea.vmem %s204, 8 [#allocation7]
        %1542 = vst.msk [vmem:[%s1541] sm:$0xff] %vm1529, %v1540
        %v1543 = vadd.f32 %v1509, %v1539
        %1545 = vrot.lane.b32.xlu0 %v1543, 32
        %v1546 = vpop.permute.xlu0 %1545
        %1548 = vst.msk [vmem:[%s1541] sm:$0xff] %vm1536, %v1546
        %s1549 = sld [smem:[#allocation5 + $0x2]]
        %v1550 = vstv %s1549
        %v1551 = vadd.f32 %v1402, %v1550
        %s1552 = scalar_lea.vmem %s204, 16 [#allocation7]
        %1553 = vst.msk [vmem:[%s1552] sm:$0xff] %vm1529, %v1551
        %v1554 = vadd.f32 %v1517, %v1550
        %1556 = vrot.lane.b32.xlu0 %v1554, 32
        %v1557 = vpop.permute.xlu0 %1556
        %1559 = vst.msk [vmem:[%s1552] sm:$0xff] %vm1536, %v1557
        %s1560 = sld [smem:[#allocation5 + $0x3]]
        %v1561 = vstv %s1560
        %v1562 = vadd.f32 %v1410, %v1561
        %s1563 = scalar_lea.vmem %s204, 24 [#allocation7]
        %1564 = vst.msk [vmem:[%s1563] sm:$0xff] %vm1529, %v1562
        %v1565 = vadd.f32 %v1525, %v1561
        %1567 = vrot.lane.b32.xlu0 %v1565, 32
        %v1568 = vpop.permute.xlu0 %1567
        %1570 = vst.msk [vmem:[%s1563] sm:$0xff] %vm1536, %v1568
        %s1571 = sand.u32 %s109, 1
        %s1572 = scalar_lea.sflag [#allocation3], %s1571
        %s1573 = sand.u32 %s109, 1
        %s1574 = smul.addr %s1573, 32
        %s1575 = scalar_lea.vmem [#allocation7], %s1574
        // Predicated region
        $region41: #{tpu_custom_call.1} parent=31 // pred_check
          %p1576 = pneg %p119
        $region42: #{tpu_custom_call.1} parent=31 // pred_check_branch
          %1578 = sbr.rel (%p1576) target = $region44
        $region43: #{tpu_custom_call.1} parent=31 // pred_region
          %1580 = vsyncadd %s1572, 0
          %s1581 = smul.addr %s23, 8
          %s1582 = sadd.s32 %s24, %s1581
          %s1583 = smul.addr %s1582, 8
          %s1584 = scalar_lea.hbm %s3, %s1583
          %s1585 = sshll.u32 %s1575, 4
          %s1586 = int_to_ptr.vmem [resolvable:$true] %s1585
          %s1587 = sshll.u32 %s1584, 4
          %s1588 = int_to_ptr.hbm [resolvable:$true] %s1587
          %1593 = dma.vmem_to_hbm [thread:$0]  %s1586, 512, %s1588, %s1572, 128, 256, 8
        $region44: #{tpu_custom_call.1} parent=31 // pred_fallthru
          _
      $region32: #{tpu_custom_call.1} parent=5 // pred_fallthru
        _
      %p1594 = scmp.le.s32.totalorder 2, %s14
      // Predicated region
      $region45: #{tpu_custom_call.1} parent=5 // pred_check
        %p1595 = pneg %p1594
      $region46: #{tpu_custom_call.1} parent=5 // pred_check_branch
        %1597 = sbr.rel (%p1595) target = $region48
      $region47: #{tpu_custom_call.1} parent=5 // pred_region
        %s1598 = ssub.s32 %s14, 2
        // Predicated region
        $region49: #{tpu_custom_call.1} parent=47 // pred_check
          %p1599 = pneg %p125
        $region50: #{tpu_custom_call.1} parent=47 // pred_check_branch
          %1601 = sbr.rel (%p1599) target = $region52
        $region51: #{tpu_custom_call.1} parent=47 // pred_region
          %s1602 = sand.u32 %s110, 1
          %s1603 = scalar_lea.sflag [#allocation3], %s1602
          %s1604 = sand.u32 %s110, 1
          %s1605 = smul.addr %s1604, 32
          %s1606 = scalar_lea.vmem [#allocation7], %s1605
          %1608 = dma.done %s1603, 512
        $region52: #{tpu_custom_call.1} parent=47 // pred_fallthru
          _
      $region48: #{tpu_custom_call.1} parent=5 // pred_fallthru
        _
    $region6: #{tpu_custom_call.1} parent=1 // loop_footer
      %s18 = sadd.s32 1, %s14
    $region7: #{tpu_custom_call.1} parent=1 // loop_footer_branch
      %13 = sbr.rel target = $region3
    $region8: #{tpu_custom_call.1} parent=1 // loop_exit
      _
    %1609 = vsyncpa [#allocation3], 1
    %s1610 = scalar_lea.sflag [#allocation3], 1
    %1611 = vsyncpa %s1610, 1
    %1612 = vsyncpa [#allocation4], 1
    %s1613 = scalar_lea.sflag [#allocation4], 1
    %1614 = vsyncpa %s1613, 1
    %1615 = vsyncpa [#allocation6], 1

</llo_original>
